<compile_context>
chip_gen: v6e
topology: v6e:2x2x1
jax: 0.10.0
libtpu: 0.0.40
codegen_flags: <defaults>
</compile_context>

<pallas_src>
import functools
import math

import jax
import jax.numpy as jnp
from jax.experimental import pallas as pl
from jax.experimental.pallas import tpu as pltpu


def _ffn_kernel(x_ref, w1_ref, b1_ref, w2_ref, b2_ref, o_ref, acc_ref):
    f = pl.program_id(1)

    @pl.when(f == 0)
    def _():
        acc_ref[...] = jnp.zeros_like(acc_ref)

    tf = w1_ref.shape[1]
    d = w1_ref.shape[2]

    x = x_ref[...]                                   # (tm, D), feed dtype
    w1 = w1_ref[...].reshape(2 * tf, d)              # (2*tf, D), feed dtype

    contract_last = (((1,), (1,)), ((), ()))         # a @ b.T

    # fc1, both chunk halves in a single MXU call: (tm, D) x (2tf, D)^T.
    y = jax.lax.dot_general(x, w1, dimension_numbers=contract_last,
                            preferred_element_type=jnp.float32)   # (tm, 2tf)

    # Lane-aligned split (tf % 128 == 0) == torch .chunk(2, dim=-1) restricted
    # to this hidden tile; biases added in f32.
    y1 = y[:, :tf] + b1_ref[0:1, :].astype(jnp.float32)
    y2 = y[:, tf:] + b1_ref[1:2, :].astype(jnp.float32)

    # SwiGLU in f32 (sigmoid runs on the EUP).
    z = (y1 * jax.nn.sigmoid(y1)) * y2

    w2 = w2_ref[...]
    z = z.astype(w2.dtype)                           # feed dtype for the MXU

    # fc2 partial product: (tm, tf) x (O, tf)^T -> f32 accumulator.
    acc_ref[...] += jax.lax.dot_general(z, w2, dimension_numbers=contract_last,
                                        preferred_element_type=jnp.float32)

    @pl.when(f == pl.num_programs(1) - 1)
    def _():
        o_ref[...] = (acc_ref[...] + b2_ref[...].astype(jnp.float32)
                      ).astype(o_ref.dtype)


def position_wise_feed_forward(x, w1, b1, w2, b2, *, tm=512, tf=512,
                               feed_dtype=jnp.bfloat16,
                               vmem_budget_bytes=None):
    """Fused FFN.  x: (..., d_model); w1: (d_ff, d_model); b1: (d_ff,);
    w2: (d_model, d_ff//2); b2: (d_model,).

    feed_dtype: dtype fed to the MXU (weights/activations are cast once in
    the wrapper; SwiGLU math and accumulation stay f32).  None => pure f32.
    """
    *lead, d_model = x.shape
    d_ff = w1.shape[0]
    assert w1.shape == (d_ff, d_model)
    assert d_ff % 2 == 0, "d_ff must be even (fc2 input width is d_ff // 2)."
    F = d_ff // 2
    assert w2.shape == (d_model, F)
    assert b1.shape == (d_ff,) and b2.shape == (d_model,)

    out_dtype = x.dtype
    compute_dtype = jnp.dtype(feed_dtype) if feed_dtype is not None else jnp.dtype(x.dtype)

    M = math.prod(lead)
    tm = min(tm, M)
    tf = min(tf, F)

    # Generation-aware VMEM budget: ~100 MiB on 128-MiB chips (v5e/v6e),
    # ~40 MiB on 64-MiB chips (v7x).
    if vmem_budget_bytes is None:
        try:
            phys = pltpu.get_tpu_info().vmem_capacity_bytes
        except Exception:
            phys = 64 * 1024 * 1024
        if phys >= 96 * 1024 * 1024:
            vmem_budget_bytes = 100 * 1024 * 1024
            vmem_limit_cap = 112 * 1024 * 1024
        else:
            vmem_budget_bytes = 40 * 1024 * 1024
            vmem_limit_cap = 48 * 1024 * 1024
    else:
        vmem_limit_cap = vmem_budget_bytes + 8 * 1024 * 1024

    in_item = compute_dtype.itemsize
    out_item = jnp.dtype(out_dtype).itemsize

    def vmem_bytes(tm_, tf_):
        # Double-buffered input/output tiles.
        dbuf = 2 * (in_item * tm_ * d_model            # x tile
                    + in_item * 2 * tf_ * d_model      # fused w1 tile (both halves)
                    + in_item * d_model * tf_          # w2 tile
                    + 4 * (2 * tf_ + d_model)          # f32 bias tiles
                    + out_item * tm_ * d_model)        # output tile
        acc = 4 * tm_ * d_model                        # f32 accumulator scratch
        # Live in-kernel f32 temporaries: y (tm, 2tf), z (tm, tf) + its cast.
        temps = 4 * tm_ * 2 * tf_ + 4 * tm_ * tf_ + in_item * tm_ * tf_
        slack = 2 * 1024 * 1024                        # Mosaic internal scratch
        return dbuf + acc + temps + slack

    # Auto-shrink: cut tf first but keep tf >= 256 (256-wide MXUs on v6e/v7x);
    # then cut tm down to 128; only as a last resort let tf drop to 128.
    while (vmem_bytes(tm, tf) > vmem_budget_bytes and tf > 256
           and tf % 2 == 0 and F % (tf // 2) == 0):
        tf //= 2
    while (vmem_bytes(tm, tf) > vmem_budget_bytes and tm > 128
           and tm % 2 == 0 and M % (tm // 2) == 0):
        tm //= 2
    while (vmem_bytes(tm, tf) > vmem_budget_bytes and tf > 128
           and tf % 2 == 0 and F % (tf // 2) == 0):
        tf //= 2

    assert M % tm == 0 and F % tf == 0, (M, tm, F, tf)
    assert tm % 8 == 0, tm
    assert tf % 128 == 0, tf   # lane-aligned chunk split inside the kernel

    nf = F // tf

    # Wrapper-side dtype feed + layout plumbing (all cheap reshapes/casts).
    xf = x.reshape(M, d_model).astype(compute_dtype)
    w1_r = w1.reshape(2, F, d_model).astype(compute_dtype)   # both chunk halves
    w2_c = w2.astype(compute_dtype)
    b1_2d = b1.reshape(2, F)                                  # stays f32
    b2_2d = b2.reshape(1, d_model)                            # stays f32

    out = pl.pallas_call(
        _ffn_kernel,
        out_shape=jax.ShapeDtypeStruct((M, d_model), out_dtype),
        grid_spec=pltpu.PrefetchScalarGridSpec(
            num_scalar_prefetch=0,
            grid=(M // tm, nf),
            in_specs=[
                # x row block: constant along f -> DMA'd once per row block.
                pl.BlockSpec((tm, d_model), lambda i, f: (i, 0)),
                # Both fc1 chunk halves in one fused weight tile / DMA stream.
                pl.BlockSpec((2, tf, d_model), lambda i, f: (0, f, 0)),
                # b1, both halves.
                pl.BlockSpec((2, tf), lambda i, f: (0, f)),
                # w2 column block matching the current hidden tile.
                pl.BlockSpec((d_model, tf), lambda i, f: (0, f)),
                # b2, fully resident.
                pl.BlockSpec((1, d_model), lambda i, f: (0, 0)),
            ],
            out_specs=pl.BlockSpec((tm, d_model), lambda i, f: (i, 0)),
            scratch_shapes=[pltpu.VMEM((tm, d_model), jnp.float32)],
        ),
        compiler_params=pltpu.CompilerParams(
            dimension_semantics=("parallel", "arbitrary"),
            vmem_limit_bytes=int(min(vmem_limit_cap,
                                     max(32 * 1024 * 1024,
                                         vmem_bytes(tm, tf) + 8 * 1024 * 1024))),
        ),
    )(xf, w1_r, b1_2d, w2_c, b2_2d)
    return out.reshape(*lead, d_model)


def position_wise_feed_forward_ref(x, w1, b1, w2, b2):
    y = jnp.einsum("...d,fd->...f", x, w1,
                   precision=jax.lax.Precision.HIGHEST) + b1
    F = y.shape[-1] // 2
    z = jax.nn.silu(y[..., :F]) * y[..., F:]
    return jnp.einsum("...f,of->...o", z, w2,
                      precision=jax.lax.Precision.HIGHEST) + b2


if __name__ == "__main__":
    # Module config: d_model=256, d_ff=1024 (so d_ff/2 = 512), batch=2, seq=128.
    B, S = 2, 128
    d_model, d_ff = 256, 1024

    key = jax.random.PRNGKey(0)
    kx, kw1, kb1, kw2, kb2 = jax.random.split(key, 5)

    x = jax.random.normal(kx, (B, S, d_model), dtype=jnp.float32)

    # Deterministic nn.Linear-style init: U(-1/sqrt(fan_in), 1/sqrt(fan_in)).
    bound1 = 1.0 / math.sqrt(d_model)
    w1 = jax.random.uniform(kw1, (d_ff, d_model), minval=-bound1,
                            maxval=bound1, dtype=jnp.float32)
    b1 = jax.random.uniform(kb1, (d_ff,), minval=-bound1, maxval=bound1,
                            dtype=jnp.float32)
    bound2 = 1.0 / math.sqrt(d_ff // 2)
    w2 = jax.random.uniform(kw2, (d_model, d_ff // 2), minval=-bound2,
                            maxval=bound2, dtype=jnp.float32)
    b2 = jax.random.uniform(kb2, (d_model,), minval=-bound2, maxval=bound2,
                            dtype=jnp.float32)

    ref = position_wise_feed_forward_ref(x, w1, b1, w2, b2)

    # Pure f32 path, small tiles: exercises the 2x2 grid and the accumulator
    # init / finalize path with a tight tolerance.
    out_f32 = position_wise_feed_forward(x, w1, b1, w2, b2, tm=128, tf=256,
                                         feed_dtype=None)
    out_f32 = jax.block_until_ready(out_f32)
    assert out_f32.shape == (B, S, d_model)
    err_f32 = float(jnp.max(jnp.abs(out_f32 - ref)))
    assert err_f32 < 2e-4, err_f32

    # Default path: bf16 MXU feed (wrapper-side casts), f32 SwiGLU + f32
    # accumulation, large tiles.  Loose tolerance by construction.
    out_def = jax.block_until_ready(
        position_wise_feed_forward(x, w1, b1, w2, b2))
    err_def = float(jnp.max(jnp.abs(out_def - ref)))
    assert err_def < 5e-2, err_def

    # Default dtype path but with small tiles (multi-step reduction axis).
    out_small = jax.block_until_ready(
        position_wise_feed_forward(x, w1, b1, w2, b2, tm=128, tf=256))
    err_small = float(jnp.max(jnp.abs(out_small - ref)))
    assert err_small < 5e-2, err_small

    print("KERNEL_OK")
</pallas_src>

<mosaic_0001>
module attributes {stable_mosaic.version = 11 : i64} {
  func.func @_ffn_kernel(%arg0: i32, %arg1: i32, %arg2: memref<128x256xf32, #tpu.memory_space<vmem>>, %arg3: memref<2x256x256xf32, #tpu.memory_space<vmem>>, %arg4: memref<2x256xf32, #tpu.memory_space<vmem>>, %arg5: memref<256x256xf32, #tpu.memory_space<vmem>>, %arg6: memref<1x256xf32, #tpu.memory_space<vmem>>, %arg7: memref<128x256xf32, #tpu.memory_space<vmem>>, %arg8: memref<128x256xf32, #tpu.memory_space<vmem>>) attributes {dimension_semantics = [#tpu.dimension_semantics<parallel>, #tpu.dimension_semantics<arbitrary>], iteration_bounds = array<i64: 2, 2>, scalar_prefetch = 0 : i64, scratch_operands = 1 : i64, tpu.core_type = #tpu.core_type<tc>, window_params = [{transform_indices = @transform_0, window_bounds = array<i64: 128, 256>}, {transform_indices = @transform_1, window_bounds = array<i64: 2, 256, 256>}, {transform_indices = @transform_2, window_bounds = array<i64: 2, 256>}, {transform_indices = @transform_3, window_bounds = array<i64: 256, 256>}, {pipeline_mode = #tpu.pipeline_mode<synchronous>, transform_indices = @transform_4, window_bounds = array<i64: 1, 256>}, {transform_indices = @transform_5, window_bounds = array<i64: 128, 256>}]} {
    %c0_i32 = arith.constant 0 : i32
    %0 = arith.cmpi eq, %arg1, %c0_i32 : i32
    %1 = arith.extui %0 : i1 to i32
    %c0_i32_0 = arith.constant 0 : i32
    %2 = arith.cmpi ne, %1, %c0_i32_0 : i32
    scf.if %2 {
      %cst_17 = arith.constant 0.000000e+00 : f32
      %30 = vector.broadcast %cst_17 : f32 to vector<128x256xf32>
      %c0_18 = arith.constant 0 : index
      %c0_19 = arith.constant 0 : index
      %31 = vector.load %arg8[%c0_18, %c0_19] : memref<128x256xf32, #tpu.memory_space<vmem>>, vector<128x256xf32>
      tpu.vector_store %arg8[%c0_18, %c0_19], %30 {strides = array<i32>} : memref<128x256xf32, #tpu.memory_space<vmem>>, vector<128x256xf32>,
    } else {
    }
    %c0 = arith.constant 0 : index
    %c0_1 = arith.constant 0 : index
    %3 = vector.load %arg2[%c0, %c0_1] : memref<128x256xf32, #tpu.memory_space<vmem>>, vector<128x256xf32>
    %c0_2 = arith.constant 0 : index
    %c0_3 = arith.constant 0 : index
    %c0_4 = arith.constant 0 : index
    %4 = vector.load %arg3[%c0_2, %c0_3, %c0_4] : memref<2x256x256xf32, #tpu.memory_space<vmem>>, vector<2x256x256xf32>
    %5 = vector.shape_cast %4 : vector<2x256x256xf32> to vector<512x256xf32>
    %cst = arith.constant dense<0.000000e+00> : vector<128x512xf32>
    %6 = tpu.matmul %3, %5, %cst {dimension_numbers = #tpu.dot_dimension_numbers<[1], [1], [0], [0], [0, 0, 1, 0], [], []>} : vector<128x256xf32>, vector<512x256xf32>, vector<128x512xf32> -> vector<128x512xf32>
    %7 = vector.extract_strided_slice %6 {offsets = [0, 0], sizes = [128, 256], strides = [1, 1]} : vector<128x512xf32> to vector<128x256xf32>
    %c0_5 = arith.constant 0 : index
    %c0_6 = arith.constant 0 : index
    %8 = vector.load %arg4[%c0_5, %c0_6] : memref<2x256xf32, #tpu.memory_space<vmem>>, vector<1x256xf32>
    %9 = vector.broadcast %8 : vector<1x256xf32> to vector<128x256xf32>
    %10 = arith.addf %7, %9 : vector<128x256xf32>
    %11 = vector.extract_strided_slice %6 {offsets = [0, 256], sizes = [128, 256], strides = [1, 1]} : vector<128x512xf32> to vector<128x256xf32>
    %c1 = arith.constant 1 : index
    %c0_7 = arith.constant 0 : index
    %12 = vector.load %arg4[%c1, %c0_7] : memref<2x256xf32, #tpu.memory_space<vmem>>, vector<1x256xf32>
    %13 = vector.broadcast %12 : vector<1x256xf32> to vector<128x256xf32>
    %14 = arith.addf %11, %13 : vector<128x256xf32>
    %15 = arith.negf %10 : vector<128x256xf32>
    %16 = math.exp %15 : vector<128x256xf32>
    %cst_8 = arith.constant 1.000000e+00 : f32
    %17 = vector.broadcast %cst_8 : f32 to vector<128x256xf32>
    %18 = arith.addf %17, %16 : vector<128x256xf32>
    %19 = arith.divf %17, %18 : vector<128x256xf32>
    %20 = arith.mulf %10, %19 : vector<128x256xf32>
    %21 = arith.mulf %20, %14 : vector<128x256xf32>
    %c0_9 = arith.constant 0 : index
    %c0_10 = arith.constant 0 : index
    %22 = vector.load %arg5[%c0_9, %c0_10] : memref<256x256xf32, #tpu.memory_space<vmem>>, vector<256x256xf32>
    %c0_11 = arith.constant 0 : index
    %c0_12 = arith.constant 0 : index
    %23 = vector.load %arg8[%c0_11, %c0_12] : memref<128x256xf32, #tpu.memory_space<vmem>>, vector<128x256xf32>
    %cst_13 = arith.constant dense<0.000000e+00> : vector<128x256xf32>
    %24 = tpu.matmul %21, %22, %cst_13 {dimension_numbers = #tpu.dot_dimension_numbers<[1], [1], [0], [0], [0, 0, 1, 0], [], []>} : vector<128x256xf32>, vector<256x256xf32>, vector<128x256xf32> -> vector<128x256xf32>
    %25 = arith.addf %23, %24 : vector<128x256xf32>
    %c0_14 = arith.constant 0 : index
    %c0_15 = arith.constant 0 : index
    %26 = vector.load %arg8[%c0_14, %c0_15] : memref<128x256xf32, #tpu.memory_space<vmem>>, vector<128x256xf32>
    tpu.vector_store %arg8[%c0_14, %c0_15], %25 {strides = array<i32>} : memref<128x256xf32, #tpu.memory_space<vmem>>, vector<128x256xf32>,
    %c1_i32 = arith.constant 1 : i32
    %27 = arith.cmpi eq, %arg1, %c1_i32 : i32
    %28 = arith.extui %27 : i1 to i32
    %c0_i32_16 = arith.constant 0 : i32
    %29 = arith.cmpi ne, %28, %c0_i32_16 : i32
    scf.if %29 {
      %c0_17 = arith.constant 0 : index
      %c0_18 = arith.constant 0 : index
      %30 = vector.load %arg8[%c0_17, %c0_18] : memref<128x256xf32, #tpu.memory_space<vmem>>, vector<128x256xf32>
      %c0_19 = arith.constant 0 : index
      %c0_20 = arith.constant 0 : index
      %31 = vector.load %arg6[%c0_19, %c0_20] : memref<1x256xf32, #tpu.memory_space<vmem>>, vector<1x256xf32>
      %32 = vector.broadcast %31 : vector<1x256xf32> to vector<128x256xf32>
      %33 = arith.addf %30, %32 : vector<128x256xf32>
      %c0_21 = arith.constant 0 : index
      %c0_22 = arith.constant 0 : index
      %34 = vector.load %arg7[%c0_21, %c0_22] : memref<128x256xf32, #tpu.memory_space<vmem>>, vector<128x256xf32>
      tpu.vector_store %arg7[%c0_21, %c0_22], %33 {strides = array<i32>} : memref<128x256xf32, #tpu.memory_space<vmem>>, vector<128x256xf32>,
    } else {
    }
    return
  }
  func.func @transform_0(%arg0: i32, %arg1: i32) -> (i32, i32) {
    %c0_i32 = arith.constant 0 : i32
    %c0_i32_0 = arith.constant 0 : i32
    return %arg0, %c0_i32 : i32, i32
  }
  func.func @transform_1(%arg0: i32, %arg1: i32) -> (i32, i32, i32) {
    %c0_i32 = arith.constant 0 : i32
    %c0_i32_0 = arith.constant 0 : i32
    %c0_i32_1 = arith.constant 0 : i32
    return %c0_i32, %arg1, %c0_i32_0 : i32, i32, i32
  }
  func.func @transform_2(%arg0: i32, %arg1: i32) -> (i32, i32) {
    %c0_i32 = arith.constant 0 : i32
    %c0_i32_0 = arith.constant 0 : i32
    return %c0_i32, %arg1 : i32, i32
  }
  func.func @transform_3(%arg0: i32, %arg1: i32) -> (i32, i32) {
    %c0_i32 = arith.constant 0 : i32
    %c0_i32_0 = arith.constant 0 : i32
    return %c0_i32, %arg1 : i32, i32
  }
  func.func @transform_4(%arg0: i32, %arg1: i32) -> (i32, i32) {
    %c0_i32 = arith.constant 0 : i32
    %c0_i32_0 = arith.constant 0 : i32
    %c0_i32_1 = arith.constant 0 : i32
    return %c0_i32, %c0_i32_0 : i32, i32
  }
  func.func @transform_5(%arg0: i32, %arg1: i32) -> (i32, i32) {
    %c0_i32 = arith.constant 0 : i32
    %c0_i32_0 = arith.constant 0 : i32
    return %arg0, %c0_i32 : i32, i32
  }
}

</mosaic_0001>

<llo_original>
// kernel: tpu_custom_call.1
$region0: #{tpu_custom_call.1}
  #allocation0 [shape = 'u32[]', space=smem, size = 0x4, offset = 0x4, fixed_abs, tag = 'smem constant byte address 0x4 - core index']
  #allocation1 [shape = 'u32[144,128]{1,0:T(1,128)}', space=vmem, size = 0x12000, scoped, tag = 'internal scratch']
  #allocation2 [shape = 'f32[128,256]{1,0:T(8,128)}', space=vmem, size = 0x20000, scoped, tag = 'scratch operand']
  #allocation12 [shape = 's32[]', space=sflag, size = 0x4, offset = 0, fixed_abs, tag = 'sflag constant byte address 0x0 - dummy sync flag']
  %s0 = inlined_call_operand.hbm [shape: f32[256,256], index: 0, kind: input, shape index: {}]
  %s1 = inlined_call_operand.hbm [shape: f32[2,512,256], index: 1, kind: input, shape index: {}]
  %s2 = inlined_call_operand.hbm [shape: f32[2,512], index: 2, kind: input, shape index: {}]
  %s3 = inlined_call_operand.hbm [shape: f32[256,512], index: 3, kind: input, shape index: {}]
  %s4 = inlined_call_operand.vmem [shape: f32[1,256], index: 4, kind: input, shape index: {}]
  %s5 = inlined_call_operand.hbm [shape: f32[256,256], index: 5, kind: output, shape index: {}]
  %s6 = sld [smem:[#allocation0]]
  $region77: #{tpu_custom_call.1} parent=0
    _
  %s8 = ssub.s32 1, %s6
  %s9 = scalar_select 0, %s8, %s6
  $region1: #{tpu_custom_call.1} parent=0
    #allocation3 [shape = 'u8[262144]{0}', space=vmem, size = 0x40000, scoped, tag = 'input window, operand 0']
    #allocation4 [shape = 's32[2]{0}', space=sflag, size = 0x8, scoped, tag = 'scoped memory for tpu_custom_call.1']
    #allocation5 [shape = 's32[2]{0}', space=sflag, size = 0x8, scoped, tag = 'scoped memory for tpu_custom_call.1']
    #allocation6 [shape = 'u8[1048576]{0}', space=vmem, size = 0x100000, scoped, tag = 'input window, operand 1']
    #allocation7 [shape = 's32[2]{0}', space=sflag, size = 0x8, scoped, tag = 'scoped memory for tpu_custom_call.1']
    #allocation8 [shape = 'u8[4096]{0}', space=vmem, size = 0x1000, scoped, tag = 'input window, operand 2']
    #allocation9 [shape = 'u8[524288]{0}', space=vmem, size = 0x80000, scoped, tag = 'input window, operand 3']
    #allocation10 [shape = 's32[2]{0}', space=sflag, size = 0x8, scoped, tag = 'scoped memory for tpu_custom_call.1']
    #allocation11 [shape = 'u8[262144]{0}', space=vmem, size = 0x40000, scoped, tag = 'output window, operand 0']
    %10 = vsyncpa [#allocation4], 0
    %s11 = scalar_lea.sflag [#allocation4], 1
    %12 = vsyncpa %s11, 0
    %13 = vsyncpa [#allocation7], 0
    %s14 = scalar_lea.sflag [#allocation7], 1
    %15 = vsyncpa %s14, 0
    %16 = vsyncpa [#allocation10], 0
    %s17 = scalar_lea.sflag [#allocation10], 1
    %18 = vsyncpa %s17, 0
    %19 = vsyncpa [#allocation5], 0
    %s20 = scalar_lea.sflag [#allocation5], 1
    %21 = vsyncpa %s20, 0
    loop: start=0, step=1, limit=6
    $region2: #{tpu_custom_call.1} parent=1 // loop_pre_header
      _
    $region3: #{tpu_custom_call.1} parent=1 // loop_header
      %s23 = sphi 0, %s27
      %p24 = scmp.ge.s32.totalorder %s23, 6
      %s30 = sphi 0, %s42
      %s31 = sphi 0, %s38
      %s32 = sphi 0, %s30
      %s33 = sphi 0, %s31
      %s34 = sphi 0, %s32
      %s35 = sphi 0, %s33
      %s45 = sphi 0, %s47
      %s48 = sphi 0, %s45
      %s49 = sphi 0, %s48
      %s65 = sphi 0, %s49
      %s71 = sphi 0, %s73
      %s74 = sphi 0, %s71
      %s75 = sphi 0, %s74
      %s91 = sphi 0, %s75
      %s97 = sphi 0, %s99
      %s100 = sphi 0, %s97
      %s101 = sphi 0, %s100
      %s117 = sphi 0, %s101
      %s123 = sphi 0, %s125
      %s126 = sphi 0, %s123
      %s127 = sphi 0, %s126
      %s143 = sphi 0, %s127
      %s147 = sphi 0, %s147
      %s149 = sphi 0, %s147
      %s150 = sphi 0, %s149
      %s164 = sphi 0, %s150
      %s170 = sphi 0, %s172
      %s173 = sphi 0, %s170
      %s174 = sphi 0, %s173
      %s190 = sphi 0, %s174
    $region4: #{tpu_custom_call.1} parent=1 // loop_header_branch
      %26 = sbr.rel (%p24) target = $region8
    $region5: #{tpu_custom_call.1} parent=1 // loop_body
      %s28 = ssub.s32 %s23, 1
      %s29 = ssub.s32 %s23, 2
      %s36 = sadd.s32 1, %s31
      %p37 = scmp.ge.s32.totalorder %s36, 2
      %s38 = scalar_select %p37, 0, %s36
      %s39 = sadd.s32 1, %s30
      %s40 = scalar_select %p37, %s39, %s30
      %p41 = scmp.ge.s32.totalorder %s40, 2
      %s42 = scalar_select %p41, 0, %s40
      %s43 = ssub.s32 %s30, %s42
      %p44 = scmp.eq.s32.totalorder %s43, 0
      %s46 = sadd.s32 %s45, 1
      %s47 = scalar_select %p44, %s45, %s46
      %p50 = pneg %p44
      %p51 = scmp.eq.s32.totalorder %s23, 3
      %p52 = por %p50, %p51
      %p53 = scmp.ne.s32.totalorder %s45, %s48
      %p54 = scmp.eq.s32.totalorder %s23, 0
      %p55 = por %p53, %p54
      %p56 = scmp.ne.s32.totalorder %s45, %s48
      %p57 = scmp.eq.s32.totalorder %s28, 3
      %p58 = por %p56, %p57
      %p59 = scmp.ne.s32.totalorder %s48, %s49
      %p60 = scmp.eq.s32.totalorder %s28, 0
      %p61 = por %p59, %p60
      %p62 = scmp.ne.s32.totalorder %s48, %s49
      %p63 = scmp.eq.s32.totalorder %s29, 3
      %p64 = por %p62, %p63
      %p66 = scmp.ne.s32.totalorder %s49, %s65
      %p67 = scmp.eq.s32.totalorder %s29, 0
      %p68 = por %p66, %p67
      %s69 = ssub.s32 %s31, %s38
      %p70 = scmp.eq.s32.totalorder %s69, 0
      %s72 = sadd.s32 %s71, 1
      %s73 = scalar_select %p70, %s71, %s72
      %p76 = pneg %p70
      %p77 = scmp.eq.s32.totalorder %s23, 3
      %p78 = por %p76, %p77
      %p79 = scmp.ne.s32.totalorder %s71, %s74
      %p80 = scmp.eq.s32.totalorder %s23, 0
      %p81 = por %p79, %p80
      %p82 = scmp.ne.s32.totalorder %s71, %s74
      %p83 = scmp.eq.s32.totalorder %s28, 3
      %p84 = por %p82, %p83
      %p85 = scmp.ne.s32.totalorder %s74, %s75
      %p86 = scmp.eq.s32.totalorder %s28, 0
      %p87 = por %p85, %p86
      %p88 = scmp.ne.s32.totalorder %s74, %s75
      %p89 = scmp.eq.s32.totalorder %s29, 3
      %p90 = por %p88, %p89
      %p92 = scmp.ne.s32.totalorder %s75, %s91
      %p93 = scmp.eq.s32.totalorder %s29, 0
      %p94 = por %p92, %p93
      %s95 = ssub.s32 %s31, %s38
      %p96 = scmp.eq.s32.totalorder %s95, 0
      %s98 = sadd.s32 %s97, 1
      %s99 = scalar_select %p96, %s97, %s98
      %p102 = pneg %p96
      %p103 = scmp.eq.s32.totalorder %s23, 3
      %p104 = por %p102, %p103
      %p105 = scmp.ne.s32.totalorder %s97, %s100
      %p106 = scmp.eq.s32.totalorder %s23, 0
      %p107 = por %p105, %p106
      %p108 = scmp.ne.s32.totalorder %s97, %s100
      %p109 = scmp.eq.s32.totalorder %s28, 3
      %p110 = por %p108, %p109
      %p111 = scmp.ne.s32.totalorder %s100, %s101
      %p112 = scmp.eq.s32.totalorder %s28, 0
      %p113 = por %p111, %p112
      %p114 = scmp.ne.s32.totalorder %s100, %s101
      %p115 = scmp.eq.s32.totalorder %s29, 3
      %p116 = por %p114, %p115
      %p118 = scmp.ne.s32.totalorder %s101, %s117
      %p119 = scmp.eq.s32.totalorder %s29, 0
      %p120 = por %p118, %p119
      %s121 = ssub.s32 %s31, %s38
      %p122 = scmp.eq.s32.totalorder %s121, 0
      %s124 = sadd.s32 %s123, 1
      %s125 = scalar_select %p122, %s123, %s124
      %p128 = pneg %p122
      %p129 = scmp.eq.s32.totalorder %s23, 3
      %p130 = por %p128, %p129
      %p131 = scmp.ne.s32.totalorder %s123, %s126
      %p132 = scmp.eq.s32.totalorder %s23, 0
      %p133 = por %p131, %p132
      %p134 = scmp.ne.s32.totalorder %s123, %s126
      %p135 = scmp.eq.s32.totalorder %s28, 3
      %p136 = por %p134, %p135
      %p137 = scmp.ne.s32.totalorder %s126, %s127
      %p138 = scmp.eq.s32.totalorder %s28, 0
      %p139 = por %p137, %p138
      %p140 = scmp.ne.s32.totalorder %s126, %s127
      %p141 = scmp.eq.s32.totalorder %s29, 3
      %p142 = por %p140, %p141
      %p144 = scmp.ne.s32.totalorder %s127, %s143
      %p145 = scmp.eq.s32.totalorder %s29, 0
      %p146 = por %p144, %p145
      %s148 = sadd.s32 %s147, 1
      %p151 = scmp.eq.s32.totalorder %s23, 3
      %p152 = scmp.ne.s32.totalorder %s147, %s149
      %p153 = scmp.eq.s32.totalorder %s23, 0
      %p154 = por %p152, %p153
      %p155 = scmp.ne.s32.totalorder %s147, %s149
      %p156 = scmp.eq.s32.totalorder %s28, 3
      %p157 = por %p155, %p156
      %p158 = scmp.ne.s32.totalorder %s149, %s150
      %p159 = scmp.eq.s32.totalorder %s28, 0
      %p160 = por %p158, %p159
      %p161 = scmp.ne.s32.totalorder %s149, %s150
      %p162 = scmp.eq.s32.totalorder %s29, 3
      %p163 = por %p161, %p162
      %p165 = scmp.ne.s32.totalorder %s150, %s164
      %p166 = scmp.eq.s32.totalorder %s29, 0
      %p167 = por %p165, %p166
      %s168 = ssub.s32 %s30, %s42
      %p169 = scmp.eq.s32.totalorder %s168, 0
      %s171 = sadd.s32 %s170, 1
      %s172 = scalar_select %p169, %s170, %s171
      %p175 = pneg %p169
      %p176 = scmp.eq.s32.totalorder %s23, 3
      %p177 = por %p175, %p176
      %p178 = scmp.ne.s32.totalorder %s170, %s173
      %p179 = scmp.eq.s32.totalorder %s23, 0
      %p180 = por %p178, %p179
      %p181 = scmp.ne.s32.totalorder %s170, %s173
      %p182 = scmp.eq.s32.totalorder %s28, 3
      %p183 = por %p181, %p182
      %p184 = scmp.ne.s32.totalorder %s173, %s174
      %p185 = scmp.eq.s32.totalorder %s28, 0
      %p186 = por %p184, %p185
      %p187 = scmp.ne.s32.totalorder %s173, %s174
      %p188 = scmp.eq.s32.totalorder %s29, 3
      %p189 = por %p187, %p188
      %p191 = scmp.ne.s32.totalorder %s174, %s190
      %p192 = scmp.eq.s32.totalorder %s29, 0
      %p193 = por %p191, %p192
      %p194 = scmp.le.s32.totalorder 1, %s23
      %p195 = scmp.lt.s32.totalorder %s23, 5
      %p196 = pnand %p194, %p195
      %p197 = pneg %p196
      // Predicated region
      $region9: #{tpu_custom_call.1} parent=5 // pred_check
        _
      $region10: #{tpu_custom_call.1} parent=5 // pred_check_branch
        %199 = sbr.rel (%p196) target = $region12
      $region11: #{tpu_custom_call.1} parent=5 // pred_region
        %s200 = ssub.s32 %s23, 1
        // Predicated region
        $region13: #{tpu_custom_call.1} parent=11 // pred_check
          %p201 = pneg %p160
        $region14: #{tpu_custom_call.1} parent=11 // pred_check_branch
          %203 = sbr.rel (%p201) target = $region16
        $region15: #{tpu_custom_call.1} parent=11 // pred_region
          _
        $region16: #{tpu_custom_call.1} parent=11 // pred_fallthru
          _
      $region12: #{tpu_custom_call.1} parent=5 // pred_fallthru
        _
      %p204 = scmp.lt.s32.totalorder %s23, 4
      // Predicated region
      $region17: #{tpu_custom_call.1} parent=5 // pred_check
        %p205 = pneg %p204
      $region18: #{tpu_custom_call.1} parent=5 // pred_check_branch
        %207 = sbr.rel (%p205) target = $region20
      $region19: #{tpu_custom_call.1} parent=5 // pred_region
        // Predicated region
        $region21: #{tpu_custom_call.1} parent=19 // pred_check
          %p208 = pneg %p55
        $region22: #{tpu_custom_call.1} parent=19 // pred_check_branch
          %210 = sbr.rel (%p208) target = $region24
        $region23: #{tpu_custom_call.1} parent=19 // pred_region
          %s211 = sand.u32 %s45, 1
          %s212 = scalar_lea.sflag [#allocation4], %s211
          %s213 = sand.u32 %s45, 1
          %s214 = smul.addr %s213, 256
          %s215 = scalar_lea.vmem [#allocation3], %s214
          %s216 = smul.u32 16, %s30
          %s218 = ssub.s32 4096, 4096
          %219 = vsyncadd %s212, %s218
          %s220 = smul.addr %s216, 2
          %s221 = smul.addr %s220, 128
          %s222 = scalar_lea.hbm %s0, %s221
          %s223 = sshll.u32 %s215, 4
          %s224 = int_to_ptr.vmem [resolvable:$true] %s223
          %229 = dma.hbm_to_vmem [thread:$0]  %s222, 4096, %s224, %s212, 256, 256, 16
        $region24: #{tpu_custom_call.1} parent=19 // pred_fallthru
          _
        // Predicated region
        $region25: #{tpu_custom_call.1} parent=19 // pred_check
          %p230 = pneg %p81
        $region26: #{tpu_custom_call.1} parent=19 // pred_check_branch
          %232 = sbr.rel (%p230) target = $region28
        $region27: #{tpu_custom_call.1} parent=19 // pred_region
          #allocation13 [shape = 'u32[6]{0}', space=smem, size = 0x18, scoped, tag = 'DMA stride descriptor']
          %s233 = sand.u32 %s23, 1
          %s234 = scalar_lea.sflag [#allocation7], %s233
          %s235 = sand.u32 %s71, 1
          %s236 = smul.addr %s235, 1024
          %s237 = scalar_lea.vmem [#allocation6], %s236
          %s238 = smul.u32 32, %s31
          %s240 = ssub.s32 16384, 16384
          %241 = vsyncadd %s234, %s240
          %s242 = smul.addr %s238, 2
          %s243 = smul.addr %s242, 128
          %s244 = scalar_lea.hbm %s1, %s243
          %s246 = sshll.u32 1, 14
          %s247 = sxor.u32 4294967295, %s246
          %s249 = sld [smem:[#allocation0]]
          %s250 = sadd.s32 2, %s249
          %s252 = sshll.u32 7, 26
          %s253 = sxor.u32 4294967295, %s252
          %s254 = sand.u32 0, %s253
          %s255 = sshll.u32 %s250, 26
          %s256 = sor.u32 %s254, %s255
          %s257 = sshll.u32 %s237, 4
          %s258 = int_to_ptr.vmem [resolvable:$true] %s257
          %264 = sst [smem:[#allocation13]] 16384
          %s265 = scalar_lea.smem [#allocation13], 1
          %266 = sst [smem:[%s265]] 8192
          %s267 = scalar_lea.smem [#allocation13], 2
          %268 = sst [smem:[%s267]] 32
          %s269 = scalar_lea.smem [#allocation13], 3
          %270 = sst [smem:[%s269]] 256
          %s271 = scalar_lea.smem [#allocation13], 4
          %272 = sst [smem:[%s271]] 256
          %s273 = scalar_lea.smem [#allocation13], 5
          %274 = sst [smem:[%s273]] 16
          %276 = dma.general %s244, 16384, %s258, %s234, 131072, [#allocation13], %s256, 0
        $region28: #{tpu_custom_call.1} parent=19 // pred_fallthru
          _
        // Predicated region
        $region29: #{tpu_custom_call.1} parent=19 // pred_check
          %p277 = pneg %p107
        $region30: #{tpu_custom_call.1} parent=19 // pred_check_branch
          %279 = sbr.rel (%p277) target = $region32
        $region31: #{tpu_custom_call.1} parent=19 // pred_region
          %s280 = sand.u32 %s23, 1
          %s281 = scalar_lea.sflag [#allocation7], %s280
          %s282 = sand.u32 %s97, 1
          %s283 = smul.addr %s282, 4
          %s284 = scalar_lea.vmem [#allocation8], %s283
          %s285 = smul.u32 2, %s31
          %s287 = ssub.s32 64, 64
          %288 = vsyncadd %s281, %s287
          %s289 = smul.addr %s285, 32
          %s290 = scalar_lea.hbm %s2, %s289
          %s292 = sshll.u32 %s284, 4
          %s293 = int_to_ptr.vmem [resolvable:$true] %s292
          %295 = dma.hbm_to_vmem [thread:$0]  %s290, 64, %s293, %s281
        $region32: #{tpu_custom_call.1} parent=19 // pred_fallthru
          _
        // Predicated region
        $region33: #{tpu_custom_call.1} parent=19 // pred_check
          %p296 = pneg %p133
        $region34: #{tpu_custom_call.1} parent=19 // pred_check_branch
          %298 = sbr.rel (%p296) target = $region36
        $region35: #{tpu_custom_call.1} parent=19 // pred_region
          %s299 = sand.u32 %s123, 1
          %s300 = scalar_lea.sflag [#allocation10], %s299
          %s301 = sand.u32 %s123, 1
          %s302 = smul.addr %s301, 512
          %s303 = scalar_lea.vmem [#allocation9], %s302
          %s304 = smul.u32 2, %s31
          %s306 = ssub.s32 8192, 8192
          %307 = vsyncadd %s300, %s306
          %s308 = smul.addr %s304, 128
          %s309 = scalar_lea.hbm %s3, %s308
          %s310 = sshll.u32 %s303, 4
          %s311 = int_to_ptr.vmem [resolvable:$true] %s310
          %316 = dma.hbm_to_vmem [thread:$0]  %s309, 8192, %s311, %s300, 512, 256, 16
        $region36: #{tpu_custom_call.1} parent=19 // pred_fallthru
          _
      $region20: #{tpu_custom_call.1} parent=5 // pred_fallthru
        _
      %p317 = scmp.le.s32.totalorder 1, %s23
      %p318 = scmp.lt.s32.totalorder %s23, 5
      %p319 = pnand %p317, %p318
      %p320 = pneg %p319
      // Predicated region
      $region37: #{tpu_custom_call.1} parent=5 // pred_check
        _
      $region38: #{tpu_custom_call.1} parent=5 // pred_check_branch
        %322 = sbr.rel (%p319) target = $region40
      $region39: #{tpu_custom_call.1} parent=5 // pred_region
        %s323 = ssub.s32 %s23, 1
        %s324 = sand.u32 %s48, 1
        %s325 = scalar_lea.sflag [#allocation4], %s324
        %s326 = sand.u32 %s48, 1
        %s327 = smul.addr %s326, 256
        %s328 = scalar_lea.vmem [#allocation3], %s327
        // Predicated region
        $region41: #{tpu_custom_call.1} parent=39 // pred_check
          %p329 = pneg %p61
        $region42: #{tpu_custom_call.1} parent=39 // pred_check_branch
          %331 = sbr.rel (%p329) target = $region44
        $region43: #{tpu_custom_call.1} parent=39 // pred_region
          %332 = dma.done %s325, 4096
        $region44: #{tpu_custom_call.1} parent=39 // pred_fallthru
          _
        %s333 = sand.u32 %s28, 1
        %s334 = scalar_lea.sflag [#allocation7], %s333
        %s335 = sand.u32 %s74, 1
        %s336 = smul.addr %s335, 1024
        %s337 = scalar_lea.vmem [#allocation6], %s336
        // Predicated region
        $region45: #{tpu_custom_call.1} parent=39 // pred_check
          %p338 = pneg %p87
        $region46: #{tpu_custom_call.1} parent=39 // pred_check_branch
          %340 = sbr.rel (%p338) target = $region48
        $region47: #{tpu_custom_call.1} parent=39 // pred_region
          %341 = dma.done %s334, 16384
        $region48: #{tpu_custom_call.1} parent=39 // pred_fallthru
          _
        %s342 = sand.u32 %s28, 1
        %s343 = scalar_lea.sflag [#allocation7], %s342
        %s344 = sand.u32 %s100, 1
        %s345 = smul.addr %s344, 4
        %s346 = scalar_lea.vmem [#allocation8], %s345
        // Predicated region
        $region49: #{tpu_custom_call.1} parent=39 // pred_check
          %p347 = pneg %p113
        $region50: #{tpu_custom_call.1} parent=39 // pred_check_branch
          %349 = sbr.rel (%p347) target = $region52
        $region51: #{tpu_custom_call.1} parent=39 // pred_region
          %350 = dma.done %s343, 64
        $region52: #{tpu_custom_call.1} parent=39 // pred_fallthru
          _
        %s351 = sand.u32 %s126, 1
        %s352 = scalar_lea.sflag [#allocation10], %s351
        %s353 = sand.u32 %s126, 1
        %s354 = smul.addr %s353, 512
        %s355 = scalar_lea.vmem [#allocation9], %s354
        // Predicated region
        $region53: #{tpu_custom_call.1} parent=39 // pred_check
          %p356 = pneg %p139
        $region54: #{tpu_custom_call.1} parent=39 // pred_check_branch
          %358 = sbr.rel (%p356) target = $region56
        $region55: #{tpu_custom_call.1} parent=39 // pred_region
          %359 = dma.done %s352, 8192
        $region56: #{tpu_custom_call.1} parent=39 // pred_fallthru
          _
        %s360 = sand.u32 %s48, 1
        %s361 = scalar_lea.sflag [#allocation4], %s360
        %s362 = sand.u32 %s48, 1
        %s363 = smul.addr %s362, 256
        %s364 = scalar_lea.vmem [#allocation3], %s363
        %p365 = pneg %p61
        %p366 = pneg %p58
        %s367 = sand.u32 %s28, 1
        %s368 = scalar_lea.sflag [#allocation7], %s367
        %s369 = sand.u32 %s74, 1
        %s370 = smul.addr %s369, 1024
        %s371 = scalar_lea.vmem [#allocation6], %s370
        %p372 = pneg %p87
        %p373 = pneg %p84
        %s374 = sand.u32 %s28, 1
        %s375 = scalar_lea.sflag [#allocation7], %s374
        %s376 = sand.u32 %s100, 1
        %s377 = smul.addr %s376, 4
        %s378 = scalar_lea.vmem [#allocation8], %s377
        %p379 = pneg %p113
        %p380 = pneg %p110
        %s381 = sand.u32 %s126, 1
        %s382 = scalar_lea.sflag [#allocation10], %s381
        %s383 = sand.u32 %s126, 1
        %s384 = smul.addr %s383, 512
        %s385 = scalar_lea.vmem [#allocation9], %s384
        %p386 = pneg %p139
        %p387 = pneg %p136
        %p388 = pneg %p160
        %p389 = pneg %p157
        %p390 = pneg %p186
        %p391 = pneg %p183
        %s392 = sand.u32 %s173, 1
        %s393 = scalar_lea.sflag [#allocation5], %s392
        %s394 = sand.u32 %s173, 1
        %s395 = smul.addr %s394, 256
        %s396 = scalar_lea.vmem [#allocation11], %s395
        %s397 = smul.u32 16, %s32
        %s398 = smul.u32 32, %s33
        %s399 = smul.u32 2, %s33
        %s400 = smul.u32 2, %s33
        %s401 = smul.u32 16, %s32
        %p402 = scmp.eq.s32.totalorder %s33, 0
        // Predicated region
        $region57: #{tpu_custom_call.1} parent=39 // pred_check
          %p403 = pneg %p402
        $region58: #{tpu_custom_call.1} parent=39 // pred_check_branch
          %405 = sbr.rel (%p403) target = $region60
        $region59: #{tpu_custom_call.1} parent=39 // pred_region
          %406 = vst [vmem:[#allocation2] sm:$0xff] 0.0
          %407 = vst [vmem:[#allocation2 + $0x8] sm:$0xff] 0.0
          %408 = vst [vmem:[#allocation2 + $0x10] sm:$0xff] 0.0
          %409 = vst [vmem:[#allocation2 + $0x18] sm:$0xff] 0.0
          %410 = vst [vmem:[#allocation2 + $0x20] sm:$0xff] 0.0
          %411 = vst [vmem:[#allocation2 + $0x28] sm:$0xff] 0.0
          %412 = vst [vmem:[#allocation2 + $0x30] sm:$0xff] 0.0
          %413 = vst [vmem:[#allocation2 + $0x38] sm:$0xff] 0.0
          %414 = vst [vmem:[#allocation2 + $0x40] sm:$0xff] 0.0
          %415 = vst [vmem:[#allocation2 + $0x48] sm:$0xff] 0.0
          %416 = vst [vmem:[#allocation2 + $0x50] sm:$0xff] 0.0
          %417 = vst [vmem:[#allocation2 + $0x58] sm:$0xff] 0.0
          %418 = vst [vmem:[#allocation2 + $0x60] sm:$0xff] 0.0
          %419 = vst [vmem:[#allocation2 + $0x68] sm:$0xff] 0.0
          %420 = vst [vmem:[#allocation2 + $0x70] sm:$0xff] 0.0
          %421 = vst [vmem:[#allocation2 + $0x78] sm:$0xff] 0.0
          %422 = vst [vmem:[#allocation2 + $0x80] sm:$0xff] 0.0
          %423 = vst [vmem:[#allocation2 + $0x88] sm:$0xff] 0.0
          %424 = vst [vmem:[#allocation2 + $0x90] sm:$0xff] 0.0
          %425 = vst [vmem:[#allocation2 + $0x98] sm:$0xff] 0.0
          %426 = vst [vmem:[#allocation2 + $0xa0] sm:$0xff] 0.0
          %427 = vst [vmem:[#allocation2 + $0xa8] sm:$0xff] 0.0
          %428 = vst [vmem:[#allocation2 + $0xb0] sm:$0xff] 0.0
          %429 = vst [vmem:[#allocation2 + $0xb8] sm:$0xff] 0.0
          %430 = vst [vmem:[#allocation2 + $0xc0] sm:$0xff] 0.0
          %431 = vst [vmem:[#allocation2 + $0xc8] sm:$0xff] 0.0
          %432 = vst [vmem:[#allocation2 + $0xd0] sm:$0xff] 0.0
          %433 = vst [vmem:[#allocation2 + $0xd8] sm:$0xff] 0.0
          %434 = vst [vmem:[#allocation2 + $0xe0] sm:$0xff] 0.0
          %435 = vst [vmem:[#allocation2 + $0xe8] sm:$0xff] 0.0
          %436 = vst [vmem:[#allocation2 + $0xf0] sm:$0xff] 0.0
          %437 = vst [vmem:[#allocation2 + $0xf8] sm:$0xff] 0.0
        $region60: #{tpu_custom_call.1} parent=39 // pred_fallthru
          _
        %v438 = vld [vmem:[%s328] sm:$0xff]
        %v439 = vld [vmem:[%s328 + $0x8] sm:$0xff]
        %v440 = vld [vmem:[%s328 + $0x10] sm:$0xff]
        %v441 = vld [vmem:[%s328 + $0x18] sm:$0xff]
        %v442 = vld [vmem:[%s328 + $0x20] sm:$0xff]
        %v443 = vld [vmem:[%s328 + $0x28] sm:$0xff]
        %v444 = vld [vmem:[%s328 + $0x30] sm:$0xff]
        %v445 = vld [vmem:[%s328 + $0x38] sm:$0xff]
        %v446 = vld [vmem:[%s328 + $0x40] sm:$0xff]
        %v447 = vld [vmem:[%s328 + $0x48] sm:$0xff]
        %v448 = vld [vmem:[%s328 + $0x50] sm:$0xff]
        %v449 = vld [vmem:[%s328 + $0x58] sm:$0xff]
        %v450 = vld [vmem:[%s328 + $0x60] sm:$0xff]
        %v451 = vld [vmem:[%s328 + $0x68] sm:$0xff]
        %v452 = vld [vmem:[%s328 + $0x70] sm:$0xff]
        %v453 = vld [vmem:[%s328 + $0x78] sm:$0xff]
        %v454 = vld [vmem:[%s328 + $0x80] sm:$0xff]
        %v455 = vld [vmem:[%s328 + $0x88] sm:$0xff]
        %v456 = vld [vmem:[%s328 + $0x90] sm:$0xff]
        %v457 = vld [vmem:[%s328 + $0x98] sm:$0xff]
        %v458 = vld [vmem:[%s328 + $0xa0] sm:$0xff]
        %v459 = vld [vmem:[%s328 + $0xa8] sm:$0xff]
        %v460 = vld [vmem:[%s328 + $0xb0] sm:$0xff]
        %v461 = vld [vmem:[%s328 + $0xb8] sm:$0xff]
        %v462 = vld [vmem:[%s328 + $0xc0] sm:$0xff]
        %v463 = vld [vmem:[%s328 + $0xc8] sm:$0xff]
        %v464 = vld [vmem:[%s328 + $0xd0] sm:$0xff]
        %v465 = vld [vmem:[%s328 + $0xd8] sm:$0xff]
        %v466 = vld [vmem:[%s328 + $0xe0] sm:$0xff]
        %v467 = vld [vmem:[%s328 + $0xe8] sm:$0xff]
        %v468 = vld [vmem:[%s328 + $0xf0] sm:$0xff]
        %v469 = vld [vmem:[%s328 + $0xf8] sm:$0xff]
        %v470 = vld [vmem:[%s337] sm:$0xff]
        %v471 = vld [vmem:[%s337 + $0x8] sm:$0xff]
        %v472 = vld [vmem:[%s337 + $0x10] sm:$0xff]
        %v473 = vld [vmem:[%s337 + $0x18] sm:$0xff]
        %v474 = vld [vmem:[%s337 + $0x20] sm:$0xff]
        %v475 = vld [vmem:[%s337 + $0x28] sm:$0xff]
        %v476 = vld [vmem:[%s337 + $0x30] sm:$0xff]
        %v477 = vld [vmem:[%s337 + $0x38] sm:$0xff]
        %v478 = vld [vmem:[%s337 + $0x40] sm:$0xff]
        %v479 = vld [vmem:[%s337 + $0x48] sm:$0xff]
        %v480 = vld [vmem:[%s337 + $0x50] sm:$0xff]
        %v481 = vld [vmem:[%s337 + $0x58] sm:$0xff]
        %v482 = vld [vmem:[%s337 + $0x60] sm:$0xff]
        %v483 = vld [vmem:[%s337 + $0x68] sm:$0xff]
        %v484 = vld [vmem:[%s337 + $0x70] sm:$0xff]
        %v485 = vld [vmem:[%s337 + $0x78] sm:$0xff]
        %v486 = vld [vmem:[%s337 + $0x80] sm:$0xff]
        %v487 = vld [vmem:[%s337 + $0x88] sm:$0xff]
        %v488 = vld [vmem:[%s337 + $0x90] sm:$0xff]
        %v489 = vld [vmem:[%s337 + $0x98] sm:$0xff]
        %v490 = vld [vmem:[%s337 + $0xa0] sm:$0xff]
        %v491 = vld [vmem:[%s337 + $0xa8] sm:$0xff]
        %v492 = vld [vmem:[%s337 + $0xb0] sm:$0xff]
        %v493 = vld [vmem:[%s337 + $0xb8] sm:$0xff]
        %v494 = vld [vmem:[%s337 + $0xc0] sm:$0xff]
        %v495 = vld [vmem:[%s337 + $0xc8] sm:$0xff]
        %v496 = vld [vmem:[%s337 + $0xd0] sm:$0xff]
        %v497 = vld [vmem:[%s337 + $0xd8] sm:$0xff]
        %v498 = vld [vmem:[%s337 + $0xe0] sm:$0xff]
        %v499 = vld [vmem:[%s337 + $0xe8] sm:$0xff]
        %v500 = vld [vmem:[%s337 + $0xf0] sm:$0xff]
        %v501 = vld [vmem:[%s337 + $0xf8] sm:$0xff]
        %v502 = vld [vmem:[%s337 + $0x100] sm:$0xff]
        %v503 = vld [vmem:[%s337 + $0x108] sm:$0xff]
        %v504 = vld [vmem:[%s337 + $0x110] sm:$0xff]
        %v505 = vld [vmem:[%s337 + $0x118] sm:$0xff]
        %v506 = vld [vmem:[%s337 + $0x120] sm:$0xff]
        %v507 = vld [vmem:[%s337 + $0x128] sm:$0xff]
        %v508 = vld [vmem:[%s337 + $0x130] sm:$0xff]
        %v509 = vld [vmem:[%s337 + $0x138] sm:$0xff]
        %v510 = vld [vmem:[%s337 + $0x140] sm:$0xff]
        %v511 = vld [vmem:[%s337 + $0x148] sm:$0xff]
        %v512 = vld [vmem:[%s337 + $0x150] sm:$0xff]
        %v513 = vld [vmem:[%s337 + $0x158] sm:$0xff]
        %v514 = vld [vmem:[%s337 + $0x160] sm:$0xff]
        %v515 = vld [vmem:[%s337 + $0x168] sm:$0xff]
        %v516 = vld [vmem:[%s337 + $0x170] sm:$0xff]
        %v517 = vld [vmem:[%s337 + $0x178] sm:$0xff]
        %v518 = vld [vmem:[%s337 + $0x180] sm:$0xff]
        %v519 = vld [vmem:[%s337 + $0x188] sm:$0xff]
        %v520 = vld [vmem:[%s337 + $0x190] sm:$0xff]
        %v521 = vld [vmem:[%s337 + $0x198] sm:$0xff]
        %v522 = vld [vmem:[%s337 + $0x1a0] sm:$0xff]
        %v523 = vld [vmem:[%s337 + $0x1a8] sm:$0xff]
        %v524 = vld [vmem:[%s337 + $0x1b0] sm:$0xff]
        %v525 = vld [vmem:[%s337 + $0x1b8] sm:$0xff]
        %v526 = vld [vmem:[%s337 + $0x1c0] sm:$0xff]
        %v527 = vld [vmem:[%s337 + $0x1c8] sm:$0xff]
        %v528 = vld [vmem:[%s337 + $0x1d0] sm:$0xff]
        %v529 = vld [vmem:[%s337 + $0x1d8] sm:$0xff]
        %v530 = vld [vmem:[%s337 + $0x1e0] sm:$0xff]
        %v531 = vld [vmem:[%s337 + $0x1e8] sm:$0xff]
        %v532 = vld [vmem:[%s337 + $0x1f0] sm:$0xff]
        %v533 = vld [vmem:[%s337 + $0x1f8] sm:$0xff]
        %v534 = vld [vmem:[%s337 + $0x200] sm:$0xff]
        %v535 = vld [vmem:[%s337 + $0x208] sm:$0xff]
        %v536 = vld [vmem:[%s337 + $0x210] sm:$0xff]
        %v537 = vld [vmem:[%s337 + $0x218] sm:$0xff]
        %v538 = vld [vmem:[%s337 + $0x220] sm:$0xff]
        %v539 = vld [vmem:[%s337 + $0x228] sm:$0xff]
        %v540 = vld [vmem:[%s337 + $0x230] sm:$0xff]
        %v541 = vld [vmem:[%s337 + $0x238] sm:$0xff]
        %v542 = vld [vmem:[%s337 + $0x240] sm:$0xff]
        %v543 = vld [vmem:[%s337 + $0x248] sm:$0xff]
        %v544 = vld [vmem:[%s337 + $0x250] sm:$0xff]
        %v545 = vld [vmem:[%s337 + $0x258] sm:$0xff]
        %v546 = vld [vmem:[%s337 + $0x260] sm:$0xff]
        %v547 = vld [vmem:[%s337 + $0x268] sm:$0xff]
        %v548 = vld [vmem:[%s337 + $0x270] sm:$0xff]
        %v549 = vld [vmem:[%s337 + $0x278] sm:$0xff]
        %v550 = vld [vmem:[%s337 + $0x280] sm:$0xff]
        %v551 = vld [vmem:[%s337 + $0x288] sm:$0xff]
        %v552 = vld [vmem:[%s337 + $0x290] sm:$0xff]
        %v553 = vld [vmem:[%s337 + $0x298] sm:$0xff]
        %v554 = vld [vmem:[%s337 + $0x2a0] sm:$0xff]
        %v555 = vld [vmem:[%s337 + $0x2a8] sm:$0xff]
        %v556 = vld [vmem:[%s337 + $0x2b0] sm:$0xff]
        %v557 = vld [vmem:[%s337 + $0x2b8] sm:$0xff]
        %v558 = vld [vmem:[%s337 + $0x2c0] sm:$0xff]
        %v559 = vld [vmem:[%s337 + $0x2c8] sm:$0xff]
        %v560 = vld [vmem:[%s337 + $0x2d0] sm:$0xff]
        %v561 = vld [vmem:[%s337 + $0x2d8] sm:$0xff]
        %v562 = vld [vmem:[%s337 + $0x2e0] sm:$0xff]
        %v563 = vld [vmem:[%s337 + $0x2e8] sm:$0xff]
        %v564 = vld [vmem:[%s337 + $0x2f0] sm:$0xff]
        %v565 = vld [vmem:[%s337 + $0x2f8] sm:$0xff]
        %v566 = vld [vmem:[%s337 + $0x300] sm:$0xff]
        %v567 = vld [vmem:[%s337 + $0x308] sm:$0xff]
        %v568 = vld [vmem:[%s337 + $0x310] sm:$0xff]
        %v569 = vld [vmem:[%s337 + $0x318] sm:$0xff]
        %v570 = vld [vmem:[%s337 + $0x320] sm:$0xff]
        %v571 = vld [vmem:[%s337 + $0x328] sm:$0xff]
        %v572 = vld [vmem:[%s337 + $0x330] sm:$0xff]
        %v573 = vld [vmem:[%s337 + $0x338] sm:$0xff]
        %v574 = vld [vmem:[%s337 + $0x340] sm:$0xff]
        %v575 = vld [vmem:[%s337 + $0x348] sm:$0xff]
        %v576 = vld [vmem:[%s337 + $0x350] sm:$0xff]
        %v577 = vld [vmem:[%s337 + $0x358] sm:$0xff]
        %v578 = vld [vmem:[%s337 + $0x360] sm:$0xff]
        %v579 = vld [vmem:[%s337 + $0x368] sm:$0xff]
        %v580 = vld [vmem:[%s337 + $0x370] sm:$0xff]
        %v581 = vld [vmem:[%s337 + $0x378] sm:$0xff]
        %v582 = vld [vmem:[%s337 + $0x380] sm:$0xff]
        %v583 = vld [vmem:[%s337 + $0x388] sm:$0xff]
        %v584 = vld [vmem:[%s337 + $0x390] sm:$0xff]
        %v585 = vld [vmem:[%s337 + $0x398] sm:$0xff]
        %v586 = vld [vmem:[%s337 + $0x3a0] sm:$0xff]
        %v587 = vld [vmem:[%s337 + $0x3a8] sm:$0xff]
        %v588 = vld [vmem:[%s337 + $0x3b0] sm:$0xff]
        %v589 = vld [vmem:[%s337 + $0x3b8] sm:$0xff]
        %v590 = vld [vmem:[%s337 + $0x3c0] sm:$0xff]
        %v591 = vld [vmem:[%s337 + $0x3c8] sm:$0xff]
        %v592 = vld [vmem:[%s337 + $0x3d0] sm:$0xff]
        %v593 = vld [vmem:[%s337 + $0x3d8] sm:$0xff]
        %v594 = vld [vmem:[%s337 + $0x3e0] sm:$0xff]
        %v595 = vld [vmem:[%s337 + $0x3e8] sm:$0xff]
        %v596 = vld [vmem:[%s337 + $0x3f0] sm:$0xff]
        %v597 = vld [vmem:[%s337 + $0x3f8] sm:$0xff]
        %598 = vmatprep.subr.mxu0 %v501
        %599 = vmatpush1.xpose.msra.mxu0 %v500
        %600 = vmatprep.subr.mxu0 %v499
        %601 = vmatpush1.xpose.msra.mxu0 %v498
        %602 = vmatprep.subr.mxu0 %v497
        %603 = vmatpush1.xpose.msra.mxu0 %v496
        %604 = vmatprep.subr.mxu0 %v495
        %605 = vmatpush1.xpose.msra.mxu0 %v494
        %606 = vmatprep.subr.mxu0 %v493
        %607 = vmatpush1.xpose.msra.mxu0 %v492
        %608 = vmatprep.subr.mxu0 %v491
        %609 = vmatpush1.xpose.msra.mxu0 %v490
        %610 = vmatprep.subr.mxu0 %v489
        %611 = vmatpush1.xpose.msra.mxu0 %v488
        %612 = vmatprep.subr.mxu0 %v487
        %613 = vmatpush1.xpose.msra.mxu0 %v486
        %614 = vmatprep.subr.mxu0 %v485
        %615 = vmatpush1.xpose.msra.mxu0 %v484
        %616 = vmatprep.subr.mxu0 %v483
        %617 = vmatpush1.xpose.msra.mxu0 %v482
        %618 = vmatprep.subr.mxu0 %v481
        %619 = vmatpush1.xpose.msra.mxu0 %v480
        %620 = vmatprep.subr.mxu0 %v479
        %621 = vmatpush1.xpose.msra.mxu0 %v478
        %622 = vmatprep.subr.mxu0 %v477
        %623 = vmatpush1.xpose.msra.mxu0 %v476
        %624 = vmatprep.subr.mxu0 %v475
        %625 = vmatpush1.xpose.msra.mxu0 %v474
        %626 = vmatprep.subr.mxu0 %v473
        %627 = vmatpush1.xpose.msra.mxu0 %v472
        %628 = vmatprep.subr.mxu0 %v471
        %629 = vmatpush1.xpose.msra.mxu0 %v470
        %630 = vmatprep.subr.mxu0 %v533
        %631 = vmatpush2.xpose.msra.mxu0 %v532
        %632 = vmatprep.subr.mxu0 %v531
        %633 = vmatpush2.xpose.msra.mxu0 %v530
        %634 = vmatprep.subr.mxu0 %v529
        %635 = vmatpush2.xpose.msra.mxu0 %v528
        %636 = vmatprep.subr.mxu0 %v527
        %637 = vmatpush2.xpose.msra.mxu0 %v526
        %638 = vmatprep.subr.mxu0 %v525
        %639 = vmatpush2.xpose.msra.mxu0 %v524
        %640 = vmatprep.subr.mxu0 %v523
        %641 = vmatpush2.xpose.msra.mxu0 %v522
        %642 = vmatprep.subr.mxu0 %v521
        %643 = vmatpush2.xpose.msra.mxu0 %v520
        %644 = vmatprep.subr.mxu0 %v519
        %645 = vmatpush2.xpose.msra.mxu0 %v518
        %646 = vmatprep.subr.mxu0 %v517
        %647 = vmatpush2.xpose.msra.mxu0 %v516
        %648 = vmatprep.subr.mxu0 %v515
        %649 = vmatpush2.xpose.msra.mxu0 %v514
        %650 = vmatprep.subr.mxu0 %v513
        %651 = vmatpush2.xpose.msra.mxu0 %v512
        %652 = vmatprep.subr.mxu0 %v511
        %653 = vmatpush2.xpose.msra.mxu0 %v510
        %654 = vmatprep.subr.mxu0 %v509
        %655 = vmatpush2.xpose.msra.mxu0 %v508
        %656 = vmatprep.subr.mxu0 %v507
        %657 = vmatpush2.xpose.msra.mxu0 %v506
        %658 = vmatprep.subr.mxu0 %v505
        %659 = vmatpush2.xpose.msra.mxu0 %v504
        %660 = vmatprep.subr.mxu0 %v503
        %661 = vmatpush2.xpose.msra.mxu0 %v502
        %662 = vmatprep.mubr.f32.mxu0 %v439
        %663 = vmatmul.mubr.f32.gmra.mxu0 %v438
        %v664 = vpop.f32.mrf.mxu0
        %v665 = vadd.f32 0.0, %v664
        %v666 = vpop.f32.mrf.mxu0
        %v667 = vadd.f32 0.0, %v666
        %668 = vmatprep.mubr.f32.mxu0 %v441
        %669 = vmatmul.mubr.f32.gmra.mxu0 %v440
        %v670 = vpop.f32.mrf.mxu0
        %v671 = vadd.f32 0.0, %v670
        %v672 = vpop.f32.mrf.mxu0
        %v673 = vadd.f32 0.0, %v672
        %674 = vmatprep.mubr.f32.mxu0 %v443
        %675 = vmatmul.mubr.f32.gmra.mxu0 %v442
        %v676 = vpop.f32.mrf.mxu0
        %v677 = vadd.f32 0.0, %v676
        %v678 = vpop.f32.mrf.mxu0
        %v679 = vadd.f32 0.0, %v678
        %680 = vmatprep.mubr.f32.mxu0 %v445
        %681 = vmatmul.mubr.f32.gmra.mxu0 %v444
        %v682 = vpop.f32.mrf.mxu0
        %v683 = vadd.f32 0.0, %v682
        %v684 = vpop.f32.mrf.mxu0
        %v685 = vadd.f32 0.0, %v684
        %686 = vmatprep.mubr.f32.mxu0 %v447
        %687 = vmatmul.mubr.f32.gmra.mxu0 %v446
        %v688 = vpop.f32.mrf.mxu0
        %v689 = vadd.f32 0.0, %v688
        %v690 = vpop.f32.mrf.mxu0
        %v691 = vadd.f32 0.0, %v690
        %692 = vmatprep.mubr.f32.mxu0 %v449
        %693 = vmatmul.mubr.f32.gmra.mxu0 %v448
        %v694 = vpop.f32.mrf.mxu0
        %v695 = vadd.f32 0.0, %v694
        %v696 = vpop.f32.mrf.mxu0
        %v697 = vadd.f32 0.0, %v696
        %698 = vmatprep.mubr.f32.mxu0 %v451
        %699 = vmatmul.mubr.f32.gmra.mxu0 %v450
        %v700 = vpop.f32.mrf.mxu0
        %v701 = vadd.f32 0.0, %v700
        %v702 = vpop.f32.mrf.mxu0
        %v703 = vadd.f32 0.0, %v702
        %704 = vmatprep.mubr.f32.mxu0 %v453
        %705 = vmatmul.mubr.f32.gmra.mxu0 %v452
        %v706 = vpop.f32.mrf.mxu0
        %v707 = vadd.f32 0.0, %v706
        %v708 = vpop.f32.mrf.mxu0
        %v709 = vadd.f32 0.0, %v708
        %710 = vmatprep.mubr.f32.mxu0 %v455
        %711 = vmatmul.mubr.f32.gmra.mxu0 %v454
        %v712 = vpop.f32.mrf.mxu0
        %v713 = vadd.f32 0.0, %v712
        %v714 = vpop.f32.mrf.mxu0
        %v715 = vadd.f32 0.0, %v714
        %716 = vmatprep.mubr.f32.mxu0 %v457
        %717 = vmatmul.mubr.f32.gmra.mxu0 %v456
        %v718 = vpop.f32.mrf.mxu0
        %v719 = vadd.f32 0.0, %v718
        %v720 = vpop.f32.mrf.mxu0
        %v721 = vadd.f32 0.0, %v720
        %722 = vmatprep.mubr.f32.mxu0 %v459
        %723 = vmatmul.mubr.f32.gmra.mxu0 %v458
        %v724 = vpop.f32.mrf.mxu0
        %v725 = vadd.f32 0.0, %v724
        %v726 = vpop.f32.mrf.mxu0
        %v727 = vadd.f32 0.0, %v726
        %728 = vmatprep.mubr.f32.mxu0 %v461
        %729 = vmatmul.mubr.f32.gmra.mxu0 %v460
        %v730 = vpop.f32.mrf.mxu0
        %v731 = vadd.f32 0.0, %v730
        %v732 = vpop.f32.mrf.mxu0
        %v733 = vadd.f32 0.0, %v732
        %734 = vmatprep.mubr.f32.mxu0 %v463
        %735 = vmatmul.mubr.f32.gmra.mxu0 %v462
        %v736 = vpop.f32.mrf.mxu0
        %v737 = vadd.f32 0.0, %v736
        %v738 = vpop.f32.mrf.mxu0
        %v739 = vadd.f32 0.0, %v738
        %740 = vmatprep.mubr.f32.mxu0 %v465
        %741 = vmatmul.mubr.f32.gmra.mxu0 %v464
        %v742 = vpop.f32.mrf.mxu0
        %v743 = vadd.f32 0.0, %v742
        %v744 = vpop.f32.mrf.mxu0
        %v745 = vadd.f32 0.0, %v744
        %746 = vmatprep.mubr.f32.mxu0 %v467
        %747 = vmatmul.mubr.f32.gmra.mxu0 %v466
        %v748 = vpop.f32.mrf.mxu0
        %v749 = vadd.f32 0.0, %v748
        %v750 = vpop.f32.mrf.mxu0
        %v751 = vadd.f32 0.0, %v750
        %752 = vmatprep.mubr.f32.mxu0 %v469
        %753 = vmatmul.mubr.f32.gmra.mxu0 %v468
        %v754 = vpop.f32.mrf.mxu0
        %v755 = vadd.f32 0.0, %v754
        %v756 = vpop.f32.mrf.mxu0
        %v757 = vadd.f32 0.0, %v756
        %758 = vdwg.mxu0
        %759 = vmatprep.subr.mxu0 %v565
        %760 = vmatpush1.xpose.msra.mxu0 %v564
        %761 = vmatprep.subr.mxu0 %v563
        %762 = vmatpush1.xpose.msra.mxu0 %v562
        %763 = vmatprep.subr.mxu0 %v561
        %764 = vmatpush1.xpose.msra.mxu0 %v560
        %765 = vmatprep.subr.mxu0 %v559
        %766 = vmatpush1.xpose.msra.mxu0 %v558
        %767 = vmatprep.subr.mxu0 %v557
        %768 = vmatpush1.xpose.msra.mxu0 %v556
        %769 = vmatprep.subr.mxu0 %v555
        %770 = vmatpush1.xpose.msra.mxu0 %v554
        %771 = vmatprep.subr.mxu0 %v553
        %772 = vmatpush1.xpose.msra.mxu0 %v552
        %773 = vmatprep.subr.mxu0 %v551
        %774 = vmatpush1.xpose.msra.mxu0 %v550
        %775 = vmatprep.subr.mxu0 %v549
        %776 = vmatpush1.xpose.msra.mxu0 %v548
        %777 = vmatprep.subr.mxu0 %v547
        %778 = vmatpush1.xpose.msra.mxu0 %v546
        %779 = vmatprep.subr.mxu0 %v545
        %780 = vmatpush1.xpose.msra.mxu0 %v544
        %781 = vmatprep.subr.mxu0 %v543
        %782 = vmatpush1.xpose.msra.mxu0 %v542
        %783 = vmatprep.subr.mxu0 %v541
        %784 = vmatpush1.xpose.msra.mxu0 %v540
        %785 = vmatprep.subr.mxu0 %v539
        %786 = vmatpush1.xpose.msra.mxu0 %v538
        %787 = vmatprep.subr.mxu0 %v537
        %788 = vmatpush1.xpose.msra.mxu0 %v536
        %789 = vmatprep.subr.mxu0 %v535
        %790 = vmatpush1.xpose.msra.mxu0 %v534
        %791 = vmatprep.subr.mxu0 %v597
        %792 = vmatpush2.xpose.msra.mxu0 %v596
        %793 = vmatprep.subr.mxu0 %v595
        %794 = vmatpush2.xpose.msra.mxu0 %v594
        %795 = vmatprep.subr.mxu0 %v593
        %796 = vmatpush2.xpose.msra.mxu0 %v592
        %797 = vmatprep.subr.mxu0 %v591
        %798 = vmatpush2.xpose.msra.mxu0 %v590
        %799 = vmatprep.subr.mxu0 %v589
        %800 = vmatpush2.xpose.msra.mxu0 %v588
        %801 = vmatprep.subr.mxu0 %v587
        %802 = vmatpush2.xpose.msra.mxu0 %v586
        %803 = vmatprep.subr.mxu0 %v585
        %804 = vmatpush2.xpose.msra.mxu0 %v584
        %805 = vmatprep.subr.mxu0 %v583
        %806 = vmatpush2.xpose.msra.mxu0 %v582
        %807 = vmatprep.subr.mxu0 %v581
        %808 = vmatpush2.xpose.msra.mxu0 %v580
        %809 = vmatprep.subr.mxu0 %v579
        %810 = vmatpush2.xpose.msra.mxu0 %v578
        %811 = vmatprep.subr.mxu0 %v577
        %812 = vmatpush2.xpose.msra.mxu0 %v576
        %813 = vmatprep.subr.mxu0 %v575
        %814 = vmatpush2.xpose.msra.mxu0 %v574
        %815 = vmatprep.subr.mxu0 %v573
        %816 = vmatpush2.xpose.msra.mxu0 %v572
        %817 = vmatprep.subr.mxu0 %v571
        %818 = vmatpush2.xpose.msra.mxu0 %v570
        %819 = vmatprep.subr.mxu0 %v569
        %820 = vmatpush2.xpose.msra.mxu0 %v568
        %821 = vmatprep.subr.mxu0 %v567
        %822 = vmatpush2.xpose.msra.mxu0 %v566
        %823 = vmatprep.mubr.f32.mxu0 %v439
        %824 = vmatmul.mubr.f32.gmra.mxu0 %v438
        %v825 = vpop.f32.mrf.mxu0
        %v826 = vadd.f32 0.0, %v825
        %v827 = vpop.f32.mrf.mxu0
        %v828 = vadd.f32 0.0, %v827
        %829 = vmatprep.mubr.f32.mxu0 %v441
        %830 = vmatmul.mubr.f32.gmra.mxu0 %v440
        %v831 = vpop.f32.mrf.mxu0
        %v832 = vadd.f32 0.0, %v831
        %v833 = vpop.f32.mrf.mxu0
        %v834 = vadd.f32 0.0, %v833
        %835 = vmatprep.mubr.f32.mxu0 %v443
        %836 = vmatmul.mubr.f32.gmra.mxu0 %v442
        %v837 = vpop.f32.mrf.mxu0
        %v838 = vadd.f32 0.0, %v837
        %v839 = vpop.f32.mrf.mxu0
        %v840 = vadd.f32 0.0, %v839
        %841 = vmatprep.mubr.f32.mxu0 %v445
        %842 = vmatmul.mubr.f32.gmra.mxu0 %v444
        %v843 = vpop.f32.mrf.mxu0
        %v844 = vadd.f32 0.0, %v843
        %v845 = vpop.f32.mrf.mxu0
        %v846 = vadd.f32 0.0, %v845
        %847 = vmatprep.mubr.f32.mxu0 %v447
        %848 = vmatmul.mubr.f32.gmra.mxu0 %v446
        %v849 = vpop.f32.mrf.mxu0
        %v850 = vadd.f32 0.0, %v849
        %v851 = vpop.f32.mrf.mxu0
        %v852 = vadd.f32 0.0, %v851
        %853 = vmatprep.mubr.f32.mxu0 %v449
        %854 = vmatmul.mubr.f32.gmra.mxu0 %v448
        %v855 = vpop.f32.mrf.mxu0
        %v856 = vadd.f32 0.0, %v855
        %v857 = vpop.f32.mrf.mxu0
        %v858 = vadd.f32 0.0, %v857
        %859 = vmatprep.mubr.f32.mxu0 %v451
        %860 = vmatmul.mubr.f32.gmra.mxu0 %v450
        %v861 = vpop.f32.mrf.mxu0
        %v862 = vadd.f32 0.0, %v861
        %v863 = vpop.f32.mrf.mxu0
        %v864 = vadd.f32 0.0, %v863
        %865 = vmatprep.mubr.f32.mxu0 %v453
        %866 = vmatmul.mubr.f32.gmra.mxu0 %v452
        %v867 = vpop.f32.mrf.mxu0
        %v868 = vadd.f32 0.0, %v867
        %v869 = vpop.f32.mrf.mxu0
        %v870 = vadd.f32 0.0, %v869
        %871 = vmatprep.mubr.f32.mxu0 %v455
        %872 = vmatmul.mubr.f32.gmra.mxu0 %v454
        %v873 = vpop.f32.mrf.mxu0
        %v874 = vadd.f32 0.0, %v873
        %v875 = vpop.f32.mrf.mxu0
        %v876 = vadd.f32 0.0, %v875
        %877 = vmatprep.mubr.f32.mxu0 %v457
        %878 = vmatmul.mubr.f32.gmra.mxu0 %v456
        %v879 = vpop.f32.mrf.mxu0
        %v880 = vadd.f32 0.0, %v879
        %v881 = vpop.f32.mrf.mxu0
        %v882 = vadd.f32 0.0, %v881
        %883 = vmatprep.mubr.f32.mxu0 %v459
        %884 = vmatmul.mubr.f32.gmra.mxu0 %v458
        %v885 = vpop.f32.mrf.mxu0
        %v886 = vadd.f32 0.0, %v885
        %v887 = vpop.f32.mrf.mxu0
        %v888 = vadd.f32 0.0, %v887
        %889 = vmatprep.mubr.f32.mxu0 %v461
        %890 = vmatmul.mubr.f32.gmra.mxu0 %v460
        %v891 = vpop.f32.mrf.mxu0
        %v892 = vadd.f32 0.0, %v891
        %v893 = vpop.f32.mrf.mxu0
        %v894 = vadd.f32 0.0, %v893
        %895 = vmatprep.mubr.f32.mxu0 %v463
        %896 = vmatmul.mubr.f32.gmra.mxu0 %v462
        %v897 = vpop.f32.mrf.mxu0
        %v898 = vadd.f32 0.0, %v897
        %v899 = vpop.f32.mrf.mxu0
        %v900 = vadd.f32 0.0, %v899
        %901 = vmatprep.mubr.f32.mxu0 %v465
        %902 = vmatmul.mubr.f32.gmra.mxu0 %v464
        %v903 = vpop.f32.mrf.mxu0
        %v904 = vadd.f32 0.0, %v903
        %v905 = vpop.f32.mrf.mxu0
        %v906 = vadd.f32 0.0, %v905
        %907 = vmatprep.mubr.f32.mxu0 %v467
        %908 = vmatmul.mubr.f32.gmra.mxu0 %v466
        %v909 = vpop.f32.mrf.mxu0
        %v910 = vadd.f32 0.0, %v909
        %v911 = vpop.f32.mrf.mxu0
        %v912 = vadd.f32 0.0, %v911
        %913 = vmatprep.mubr.f32.mxu0 %v469
        %914 = vmatmul.mubr.f32.gmra.mxu0 %v468
        %v915 = vpop.f32.mrf.mxu0
        %v916 = vadd.f32 0.0, %v915
        %v917 = vpop.f32.mrf.mxu0
        %v918 = vadd.f32 0.0, %v917
        %919 = vdwg.mxu0
        %v920 = vld [vmem:[%s346] ss:$2 sm:$0x3]
        %v922 = vlaneseq
        %v923 = vshrl.u32 %v922, 7
        %v924 = vsub.s32 0, %v923
        %v925 = vrot.slane %v920, %v924
        %v926 = vlaneseq
        %v927 = vshrl.u32 %v926, 7
        %v928 = vsub.s32 1, %v927
        %v929 = vrot.slane %v920, %v928
        %v932 = vadd.f32 %v665, %v925
        %v933 = vadd.f32 %v667, %v929
        %v934 = vadd.f32 %v671, %v925
        %v935 = vadd.f32 %v673, %v929
        %v936 = vadd.f32 %v677, %v925
        %v937 = vadd.f32 %v679, %v929
        %v938 = vadd.f32 %v683, %v925
        %v939 = vadd.f32 %v685, %v929
        %v940 = vadd.f32 %v689, %v925
        %v941 = vadd.f32 %v691, %v929
        %v942 = vadd.f32 %v695, %v925
        %v943 = vadd.f32 %v697, %v929
        %v944 = vadd.f32 %v701, %v925
        %v945 = vadd.f32 %v703, %v929
        %v946 = vadd.f32 %v707, %v925
        %v947 = vadd.f32 %v709, %v929
        %v948 = vadd.f32 %v713, %v925
        %v949 = vadd.f32 %v715, %v929
        %v950 = vadd.f32 %v719, %v925
        %v951 = vadd.f32 %v721, %v929
        %v952 = vadd.f32 %v725, %v925
        %v953 = vadd.f32 %v727, %v929
        %v954 = vadd.f32 %v731, %v925
        %v955 = vadd.f32 %v733, %v929
        %v956 = vadd.f32 %v737, %v925
        %v957 = vadd.f32 %v739, %v929
        %v958 = vadd.f32 %v743, %v925
        %v959 = vadd.f32 %v745, %v929
        %v960 = vadd.f32 %v749, %v925
        %v961 = vadd.f32 %v751, %v929
        %v962 = vadd.f32 %v755, %v925
        %v963 = vadd.f32 %v757, %v929
        %s964 = scalar_lea.vmem %s346, 1 [#allocation8]
        %v965 = vld [vmem:[%s964] ss:$2 sm:$0x3]
        %v967 = vlaneseq
        %v968 = vshrl.u32 %v967, 7
        %v969 = vsub.s32 0, %v968
        %v970 = vrot.slane %v965, %v969
        %v971 = vlaneseq
        %v972 = vshrl.u32 %v971, 7
        %v973 = vsub.s32 1, %v972
        %v974 = vrot.slane %v965, %v973
        %v977 = vadd.f32 %v826, %v970
        %v978 = vadd.f32 %v828, %v974
        %v979 = vadd.f32 %v832, %v970
        %v980 = vadd.f32 %v834, %v974
        %v981 = vadd.f32 %v838, %v970
        %v982 = vadd.f32 %v840, %v974
        %v983 = vadd.f32 %v844, %v970
        %v984 = vadd.f32 %v846, %v974
        %v985 = vadd.f32 %v850, %v970
        %v986 = vadd.f32 %v852, %v974
        %v987 = vadd.f32 %v856, %v970
        %v988 = vadd.f32 %v858, %v974
        %v989 = vadd.f32 %v862, %v970
        %v990 = vadd.f32 %v864, %v974
        %v991 = vadd.f32 %v868, %v970
        %v992 = vadd.f32 %v870, %v974
        %v993 = vadd.f32 %v874, %v970
        %v994 = vadd.f32 %v876, %v974
        %v995 = vadd.f32 %v880, %v970
        %v996 = vadd.f32 %v882, %v974
        %v997 = vadd.f32 %v886, %v970
        %v998 = vadd.f32 %v888, %v974
        %v999 = vadd.f32 %v892, %v970
        %v1000 = vadd.f32 %v894, %v974
        %v1001 = vadd.f32 %v898, %v970
        %v1002 = vadd.f32 %v900, %v974
        %v1003 = vadd.f32 %v904, %v970
        %v1004 = vadd.f32 %v906, %v974
        %v1005 = vadd.f32 %v910, %v970
        %v1006 = vadd.f32 %v912, %v974
        %v1007 = vadd.f32 %v916, %v970
        %v1008 = vadd.f32 %v918, %v974
        %v1009 = vxor.u32 %v932, 2147483648
        %v1010 = vxor.u32 %v933, 2147483648
        %v1011 = vxor.u32 %v934, 2147483648
        %v1012 = vxor.u32 %v935, 2147483648
        %v1013 = vxor.u32 %v936, 2147483648
        %v1014 = vxor.u32 %v937, 2147483648
        %v1015 = vxor.u32 %v938, 2147483648
        %v1016 = vxor.u32 %v939, 2147483648
        %v1017 = vxor.u32 %v940, 2147483648
        %v1018 = vxor.u32 %v941, 2147483648
        %v1019 = vxor.u32 %v942, 2147483648
        %v1020 = vxor.u32 %v943, 2147483648
        %v1021 = vxor.u32 %v944, 2147483648
        %v1022 = vxor.u32 %v945, 2147483648
        %v1023 = vxor.u32 %v946, 2147483648
        %v1024 = vxor.u32 %v947, 2147483648
        %v1025 = vxor.u32 %v948, 2147483648
        %v1026 = vxor.u32 %v949, 2147483648
        %v1027 = vxor.u32 %v950, 2147483648
        %v1028 = vxor.u32 %v951, 2147483648
        %v1029 = vxor.u32 %v952, 2147483648
        %v1030 = vxor.u32 %v953, 2147483648
        %v1031 = vxor.u32 %v954, 2147483648
        %v1032 = vxor.u32 %v955, 2147483648
        %v1033 = vxor.u32 %v956, 2147483648
        %v1034 = vxor.u32 %v957, 2147483648
        %v1035 = vxor.u32 %v958, 2147483648
        %v1036 = vxor.u32 %v959, 2147483648
        %v1037 = vxor.u32 %v960, 2147483648
        %v1038 = vxor.u32 %v961, 2147483648
        %v1039 = vxor.u32 %v962, 2147483648
        %v1040 = vxor.u32 %v963, 2147483648
        %v1041 = vmul.f32 %v1009, 1.442695
        %v1042 = vpow.pop %v1041
        %v1043 = vmul.f32 %v1010, 1.442695
        %v1044 = vpow.pop %v1043
        %v1045 = vmul.f32 %v1011, 1.442695
        %v1046 = vpow.pop %v1045
        %v1047 = vmul.f32 %v1012, 1.442695
        %v1048 = vpow.pop %v1047
        %v1049 = vmul.f32 %v1013, 1.442695
        %v1050 = vpow.pop %v1049
        %v1051 = vmul.f32 %v1014, 1.442695
        %v1052 = vpow.pop %v1051
        %v1053 = vmul.f32 %v1015, 1.442695
        %v1054 = vpow.pop %v1053
        %v1055 = vmul.f32 %v1016, 1.442695
        %v1056 = vpow.pop %v1055
        %v1057 = vmul.f32 %v1017, 1.442695
        %v1058 = vpow.pop %v1057
        %v1059 = vmul.f32 %v1018, 1.442695
        %v1060 = vpow.pop %v1059
        %v1061 = vmul.f32 %v1019, 1.442695
        %v1062 = vpow.pop %v1061
        %v1063 = vmul.f32 %v1020, 1.442695
        %v1064 = vpow.pop %v1063
        %v1065 = vmul.f32 %v1021, 1.442695
        %v1066 = vpow.pop %v1065
        %v1067 = vmul.f32 %v1022, 1.442695
        %v1068 = vpow.pop %v1067
        %v1069 = vmul.f32 %v1023, 1.442695
        %v1070 = vpow.pop %v1069
        %v1071 = vmul.f32 %v1024, 1.442695
        %v1072 = vpow.pop %v1071
        %v1073 = vmul.f32 %v1025, 1.442695
        %v1074 = vpow.pop %v1073
        %v1075 = vmul.f32 %v1026, 1.442695
        %v1076 = vpow.pop %v1075
        %v1077 = vmul.f32 %v1027, 1.442695
        %v1078 = vpow.pop %v1077
        %v1079 = vmul.f32 %v1028, 1.442695
        %v1080 = vpow.pop %v1079
        %v1081 = vmul.f32 %v1029, 1.442695
        %v1082 = vpow.pop %v1081
        %v1083 = vmul.f32 %v1030, 1.442695
        %v1084 = vpow.pop %v1083
        %v1085 = vmul.f32 %v1031, 1.442695
        %v1086 = vpow.pop %v1085
        %v1087 = vmul.f32 %v1032, 1.442695
        %v1088 = vpow.pop %v1087
        %v1089 = vmul.f32 %v1033, 1.442695
        %v1090 = vpow.pop %v1089
        %v1091 = vmul.f32 %v1034, 1.442695
        %v1092 = vpow.pop %v1091
        %v1093 = vmul.f32 %v1035, 1.442695
        %v1094 = vpow.pop %v1093
        %v1095 = vmul.f32 %v1036, 1.442695
        %v1096 = vpow.pop %v1095
        %v1097 = vmul.f32 %v1037, 1.442695
        %v1098 = vpow.pop %v1097
        %v1099 = vmul.f32 %v1038, 1.442695
        %v1100 = vpow.pop %v1099
        %v1101 = vmul.f32 %v1039, 1.442695
        %v1102 = vpow.pop %v1101
        %v1103 = vmul.f32 %v1040, 1.442695
        %v1104 = vpow.pop %v1103
        %v1105 = vadd.f32 %v1042, 1.0
        %v1106 = vadd.f32 %v1044, 1.0
        %v1107 = vadd.f32 %v1046, 1.0
        %v1108 = vadd.f32 %v1048, 1.0
        %v1109 = vadd.f32 %v1050, 1.0
        %v1110 = vadd.f32 %v1052, 1.0
        %v1111 = vadd.f32 %v1054, 1.0
        %v1112 = vadd.f32 %v1056, 1.0
        %v1113 = vadd.f32 %v1058, 1.0
        %v1114 = vadd.f32 %v1060, 1.0
        %v1115 = vadd.f32 %v1062, 1.0
        %v1116 = vadd.f32 %v1064, 1.0
        %v1117 = vadd.f32 %v1066, 1.0
        %v1118 = vadd.f32 %v1068, 1.0
        %v1119 = vadd.f32 %v1070, 1.0
        %v1120 = vadd.f32 %v1072, 1.0
        %v1121 = vadd.f32 %v1074, 1.0
        %v1122 = vadd.f32 %v1076, 1.0
        %v1123 = vadd.f32 %v1078, 1.0
        %v1124 = vadd.f32 %v1080, 1.0
        %v1125 = vadd.f32 %v1082, 1.0
        %v1126 = vadd.f32 %v1084, 1.0
        %v1127 = vadd.f32 %v1086, 1.0
        %v1128 = vadd.f32 %v1088, 1.0
        %v1129 = vadd.f32 %v1090, 1.0
        %v1130 = vadd.f32 %v1092, 1.0
        %v1131 = vadd.f32 %v1094, 1.0
        %v1132 = vadd.f32 %v1096, 1.0
        %v1133 = vadd.f32 %v1098, 1.0
        %v1134 = vadd.f32 %v1100, 1.0
        %v1135 = vadd.f32 %v1102, 1.0
        %v1136 = vadd.f32 %v1104, 1.0
        %v1137 = vrcp.pop %v1105
        %v1138 = vmul.f32 1.0, %v1137
        %v1139 = vrcp.pop %v1106
        %v1140 = vmul.f32 1.0, %v1139
        %v1141 = vrcp.pop %v1107
        %v1142 = vmul.f32 1.0, %v1141
        %v1143 = vrcp.pop %v1108
        %v1144 = vmul.f32 1.0, %v1143
        %v1145 = vrcp.pop %v1109
        %v1146 = vmul.f32 1.0, %v1145
        %v1147 = vrcp.pop %v1110
        %v1148 = vmul.f32 1.0, %v1147
        %v1149 = vrcp.pop %v1111
        %v1150 = vmul.f32 1.0, %v1149
        %v1151 = vrcp.pop %v1112
        %v1152 = vmul.f32 1.0, %v1151
        %v1153 = vrcp.pop %v1113
        %v1154 = vmul.f32 1.0, %v1153
        %v1155 = vrcp.pop %v1114
        %v1156 = vmul.f32 1.0, %v1155
        %v1157 = vrcp.pop %v1115
        %v1158 = vmul.f32 1.0, %v1157
        %v1159 = vrcp.pop %v1116
        %v1160 = vmul.f32 1.0, %v1159
        %v1161 = vrcp.pop %v1117
        %v1162 = vmul.f32 1.0, %v1161
        %v1163 = vrcp.pop %v1118
        %v1164 = vmul.f32 1.0, %v1163
        %v1165 = vrcp.pop %v1119
        %v1166 = vmul.f32 1.0, %v1165
        %v1167 = vrcp.pop %v1120
        %v1168 = vmul.f32 1.0, %v1167
        %v1169 = vrcp.pop %v1121
        %v1170 = vmul.f32 1.0, %v1169
        %v1171 = vrcp.pop %v1122
        %v1172 = vmul.f32 1.0, %v1171
        %v1173 = vrcp.pop %v1123
        %v1174 = vmul.f32 1.0, %v1173
        %v1175 = vrcp.pop %v1124
        %v1176 = vmul.f32 1.0, %v1175
        %v1177 = vrcp.pop %v1125
        %v1178 = vmul.f32 1.0, %v1177
        %v1179 = vrcp.pop %v1126
        %v1180 = vmul.f32 1.0, %v1179
        %v1181 = vrcp.pop %v1127
        %v1182 = vmul.f32 1.0, %v1181
        %v1183 = vrcp.pop %v1128
        %v1184 = vmul.f32 1.0, %v1183
        %v1185 = vrcp.pop %v1129
        %v1186 = vmul.f32 1.0, %v1185
        %v1187 = vrcp.pop %v1130
        %v1188 = vmul.f32 1.0, %v1187
        %v1189 = vrcp.pop %v1131
        %v1190 = vmul.f32 1.0, %v1189
        %v1191 = vrcp.pop %v1132
        %v1192 = vmul.f32 1.0, %v1191
        %v1193 = vrcp.pop %v1133
        %v1194 = vmul.f32 1.0, %v1193
        %v1195 = vrcp.pop %v1134
        %v1196 = vmul.f32 1.0, %v1195
        %v1197 = vrcp.pop %v1135
        %v1198 = vmul.f32 1.0, %v1197
        %v1199 = vrcp.pop %v1136
        %v1200 = vmul.f32 1.0, %v1199
        %v1201 = vmul.f32 %v932, %v1138
        %v1202 = vmul.f32 %v933, %v1140
        %v1203 = vmul.f32 %v934, %v1142
        %v1204 = vmul.f32 %v935, %v1144
        %v1205 = vmul.f32 %v936, %v1146
        %v1206 = vmul.f32 %v937, %v1148
        %v1207 = vmul.f32 %v938, %v1150
        %v1208 = vmul.f32 %v939, %v1152
        %v1209 = vmul.f32 %v940, %v1154
        %v1210 = vmul.f32 %v941, %v1156
        %v1211 = vmul.f32 %v942, %v1158
        %v1212 = vmul.f32 %v943, %v1160
        %v1213 = vmul.f32 %v944, %v1162
        %v1214 = vmul.f32 %v945, %v1164
        %v1215 = vmul.f32 %v946, %v1166
        %v1216 = vmul.f32 %v947, %v1168
        %v1217 = vmul.f32 %v948, %v1170
        %v1218 = vmul.f32 %v949, %v1172
        %v1219 = vmul.f32 %v950, %v1174
        %v1220 = vmul.f32 %v951, %v1176
        %v1221 = vmul.f32 %v952, %v1178
        %v1222 = vmul.f32 %v953, %v1180
        %v1223 = vmul.f32 %v954, %v1182
        %v1224 = vmul.f32 %v955, %v1184
        %v1225 = vmul.f32 %v956, %v1186
        %v1226 = vmul.f32 %v957, %v1188
        %v1227 = vmul.f32 %v958, %v1190
        %v1228 = vmul.f32 %v959, %v1192
        %v1229 = vmul.f32 %v960, %v1194
        %v1230 = vmul.f32 %v961, %v1196
        %v1231 = vmul.f32 %v962, %v1198
        %v1232 = vmul.f32 %v963, %v1200
        %v1233 = vmul.f32 %v1201, %v977
        %v1234 = vmul.f32 %v1202, %v978
        %v1235 = vmul.f32 %v1203, %v979
        %v1236 = vmul.f32 %v1204, %v980
        %v1237 = vmul.f32 %v1205, %v981
        %v1238 = vmul.f32 %v1206, %v982
        %v1239 = vmul.f32 %v1207, %v983
        %v1240 = vmul.f32 %v1208, %v984
        %v1241 = vmul.f32 %v1209, %v985
        %v1242 = vmul.f32 %v1210, %v986
        %v1243 = vmul.f32 %v1211, %v987
        %v1244 = vmul.f32 %v1212, %v988
        %v1245 = vmul.f32 %v1213, %v989
        %v1246 = vmul.f32 %v1214, %v990
        %v1247 = vmul.f32 %v1215, %v991
        %v1248 = vmul.f32 %v1216, %v992
        %v1249 = vmul.f32 %v1217, %v993
        %v1250 = vmul.f32 %v1218, %v994
        %v1251 = vmul.f32 %v1219, %v995
        %v1252 = vmul.f32 %v1220, %v996
        %v1253 = vmul.f32 %v1221, %v997
        %v1254 = vmul.f32 %v1222, %v998
        %v1255 = vmul.f32 %v1223, %v999
        %v1256 = vmul.f32 %v1224, %v1000
        %v1257 = vmul.f32 %v1225, %v1001
        %v1258 = vmul.f32 %v1226, %v1002
        %v1259 = vmul.f32 %v1227, %v1003
        %v1260 = vmul.f32 %v1228, %v1004
        %v1261 = vmul.f32 %v1229, %v1005
        %v1262 = vmul.f32 %v1230, %v1006
        %v1263 = vmul.f32 %v1231, %v1007
        %v1264 = vmul.f32 %v1232, %v1008
        %v1265 = vld [vmem:[%s355] sm:$0xff]
        %v1266 = vld [vmem:[%s355 + $0x8] sm:$0xff]
        %v1267 = vld [vmem:[%s355 + $0x10] sm:$0xff]
        %v1268 = vld [vmem:[%s355 + $0x18] sm:$0xff]
        %v1269 = vld [vmem:[%s355 + $0x20] sm:$0xff]
        %v1270 = vld [vmem:[%s355 + $0x28] sm:$0xff]
        %v1271 = vld [vmem:[%s355 + $0x30] sm:$0xff]
        %v1272 = vld [vmem:[%s355 + $0x38] sm:$0xff]
        %v1273 = vld [vmem:[%s355 + $0x40] sm:$0xff]
        %v1274 = vld [vmem:[%s355 + $0x48] sm:$0xff]
        %v1275 = vld [vmem:[%s355 + $0x50] sm:$0xff]
        %v1276 = vld [vmem:[%s355 + $0x58] sm:$0xff]
        %v1277 = vld [vmem:[%s355 + $0x60] sm:$0xff]
        %v1278 = vld [vmem:[%s355 + $0x68] sm:$0xff]
        %v1279 = vld [vmem:[%s355 + $0x70] sm:$0xff]
        %v1280 = vld [vmem:[%s355 + $0x78] sm:$0xff]
        %v1281 = vld [vmem:[%s355 + $0x80] sm:$0xff]
        %v1282 = vld [vmem:[%s355 + $0x88] sm:$0xff]
        %v1283 = vld [vmem:[%s355 + $0x90] sm:$0xff]
        %v1284 = vld [vmem:[%s355 + $0x98] sm:$0xff]
        %v1285 = vld [vmem:[%s355 + $0xa0] sm:$0xff]
        %v1286 = vld [vmem:[%s355 + $0xa8] sm:$0xff]
        %v1287 = vld [vmem:[%s355 + $0xb0] sm:$0xff]
        %v1288 = vld [vmem:[%s355 + $0xb8] sm:$0xff]
        %v1289 = vld [vmem:[%s355 + $0xc0] sm:$0xff]
        %v1290 = vld [vmem:[%s355 + $0xc8] sm:$0xff]
        %v1291 = vld [vmem:[%s355 + $0xd0] sm:$0xff]
        %v1292 = vld [vmem:[%s355 + $0xd8] sm:$0xff]
        %v1293 = vld [vmem:[%s355 + $0xe0] sm:$0xff]
        %v1294 = vld [vmem:[%s355 + $0xe8] sm:$0xff]
        %v1295 = vld [vmem:[%s355 + $0xf0] sm:$0xff]
        %v1296 = vld [vmem:[%s355 + $0xf8] sm:$0xff]
        %v1297 = vld [vmem:[%s355 + $0x100] sm:$0xff]
        %v1298 = vld [vmem:[%s355 + $0x108] sm:$0xff]
        %v1299 = vld [vmem:[%s355 + $0x110] sm:$0xff]
        %v1300 = vld [vmem:[%s355 + $0x118] sm:$0xff]
        %v1301 = vld [vmem:[%s355 + $0x120] sm:$0xff]
        %v1302 = vld [vmem:[%s355 + $0x128] sm:$0xff]
        %v1303 = vld [vmem:[%s355 + $0x130] sm:$0xff]
        %v1304 = vld [vmem:[%s355 + $0x138] sm:$0xff]
        %v1305 = vld [vmem:[%s355 + $0x140] sm:$0xff]
        %v1306 = vld [vmem:[%s355 + $0x148] sm:$0xff]
        %v1307 = vld [vmem:[%s355 + $0x150] sm:$0xff]
        %v1308 = vld [vmem:[%s355 + $0x158] sm:$0xff]
        %v1309 = vld [vmem:[%s355 + $0x160] sm:$0xff]
        %v1310 = vld [vmem:[%s355 + $0x168] sm:$0xff]
        %v1311 = vld [vmem:[%s355 + $0x170] sm:$0xff]
        %v1312 = vld [vmem:[%s355 + $0x178] sm:$0xff]
        %v1313 = vld [vmem:[%s355 + $0x180] sm:$0xff]
        %v1314 = vld [vmem:[%s355 + $0x188] sm:$0xff]
        %v1315 = vld [vmem:[%s355 + $0x190] sm:$0xff]
        %v1316 = vld [vmem:[%s355 + $0x198] sm:$0xff]
        %v1317 = vld [vmem:[%s355 + $0x1a0] sm:$0xff]
        %v1318 = vld [vmem:[%s355 + $0x1a8] sm:$0xff]
        %v1319 = vld [vmem:[%s355 + $0x1b0] sm:$0xff]
        %v1320 = vld [vmem:[%s355 + $0x1b8] sm:$0xff]
        %v1321 = vld [vmem:[%s355 + $0x1c0] sm:$0xff]
        %v1322 = vld [vmem:[%s355 + $0x1c8] sm:$0xff]
        %v1323 = vld [vmem:[%s355 + $0x1d0] sm:$0xff]
        %v1324 = vld [vmem:[%s355 + $0x1d8] sm:$0xff]
        %v1325 = vld [vmem:[%s355 + $0x1e0] sm:$0xff]
        %v1326 = vld [vmem:[%s355 + $0x1e8] sm:$0xff]
        %v1327 = vld [vmem:[%s355 + $0x1f0] sm:$0xff]
        %v1328 = vld [vmem:[%s355 + $0x1f8] sm:$0xff]
        %v1329 = vld [vmem:[#allocation2] sm:$0xff]
        %v1330 = vld [vmem:[#allocation2 + $0x8] sm:$0xff]
        %v1331 = vld [vmem:[#allocation2 + $0x10] sm:$0xff]
        %v1332 = vld [vmem:[#allocation2 + $0x18] sm:$0xff]
        %v1333 = vld [vmem:[#allocation2 + $0x20] sm:$0xff]
        %v1334 = vld [vmem:[#allocation2 + $0x28] sm:$0xff]
        %v1335 = vld [vmem:[#allocation2 + $0x30] sm:$0xff]
        %v1336 = vld [vmem:[#allocation2 + $0x38] sm:$0xff]
        %v1337 = vld [vmem:[#allocation2 + $0x40] sm:$0xff]
        %v1338 = vld [vmem:[#allocation2 + $0x48] sm:$0xff]
        %v1339 = vld [vmem:[#allocation2 + $0x50] sm:$0xff]
        %v1340 = vld [vmem:[#allocation2 + $0x58] sm:$0xff]
        %v1341 = vld [vmem:[#allocation2 + $0x60] sm:$0xff]
        %v1342 = vld [vmem:[#allocation2 + $0x68] sm:$0xff]
        %v1343 = vld [vmem:[#allocation2 + $0x70] sm:$0xff]
        %v1344 = vld [vmem:[#allocation2 + $0x78] sm:$0xff]
        %v1345 = vld [vmem:[#allocation2 + $0x80] sm:$0xff]
        %v1346 = vld [vmem:[#allocation2 + $0x88] sm:$0xff]
        %v1347 = vld [vmem:[#allocation2 + $0x90] sm:$0xff]
        %v1348 = vld [vmem:[#allocation2 + $0x98] sm:$0xff]
        %v1349 = vld [vmem:[#allocation2 + $0xa0] sm:$0xff]
        %v1350 = vld [vmem:[#allocation2 + $0xa8] sm:$0xff]
        %v1351 = vld [vmem:[#allocation2 + $0xb0] sm:$0xff]
        %v1352 = vld [vmem:[#allocation2 + $0xb8] sm:$0xff]
        %v1353 = vld [vmem:[#allocation2 + $0xc0] sm:$0xff]
        %v1354 = vld [vmem:[#allocation2 + $0xc8] sm:$0xff]
        %v1355 = vld [vmem:[#allocation2 + $0xd0] sm:$0xff]
        %v1356 = vld [vmem:[#allocation2 + $0xd8] sm:$0xff]
        %v1357 = vld [vmem:[#allocation2 + $0xe0] sm:$0xff]
        %v1358 = vld [vmem:[#allocation2 + $0xe8] sm:$0xff]
        %v1359 = vld [vmem:[#allocation2 + $0xf0] sm:$0xff]
        %v1360 = vld [vmem:[#allocation2 + $0xf8] sm:$0xff]
        %1361 = vmatprep.subr.mxu0 %v1296
        %1362 = vmatpush1.xpose.msra.mxu0 %v1295
        %1363 = vmatprep.subr.mxu0 %v1294
        %1364 = vmatpush1.xpose.msra.mxu0 %v1293
        %1365 = vmatprep.subr.mxu0 %v1292
        %1366 = vmatpush1.xpose.msra.mxu0 %v1291
        %1367 = vmatprep.subr.mxu0 %v1290
        %1368 = vmatpush1.xpose.msra.mxu0 %v1289
        %1369 = vmatprep.subr.mxu0 %v1288
        %1370 = vmatpush1.xpose.msra.mxu0 %v1287
        %1371 = vmatprep.subr.mxu0 %v1286
        %1372 = vmatpush1.xpose.msra.mxu0 %v1285
        %1373 = vmatprep.subr.mxu0 %v1284
        %1374 = vmatpush1.xpose.msra.mxu0 %v1283
        %1375 = vmatprep.subr.mxu0 %v1282
        %1376 = vmatpush1.xpose.msra.mxu0 %v1281
        %1377 = vmatprep.subr.mxu0 %v1280
        %1378 = vmatpush1.xpose.msra.mxu0 %v1279
        %1379 = vmatprep.subr.mxu0 %v1278
        %1380 = vmatpush1.xpose.msra.mxu0 %v1277
        %1381 = vmatprep.subr.mxu0 %v1276
        %1382 = vmatpush1.xpose.msra.mxu0 %v1275
        %1383 = vmatprep.subr.mxu0 %v1274
        %1384 = vmatpush1.xpose.msra.mxu0 %v1273
        %1385 = vmatprep.subr.mxu0 %v1272
        %1386 = vmatpush1.xpose.msra.mxu0 %v1271
        %1387 = vmatprep.subr.mxu0 %v1270
        %1388 = vmatpush1.xpose.msra.mxu0 %v1269
        %1389 = vmatprep.subr.mxu0 %v1268
        %1390 = vmatpush1.xpose.msra.mxu0 %v1267
        %1391 = vmatprep.subr.mxu0 %v1266
        %1392 = vmatpush1.xpose.msra.mxu0 %v1265
        %1393 = vmatprep.subr.mxu0 %v1328
        %1394 = vmatpush2.xpose.msra.mxu0 %v1327
        %1395 = vmatprep.subr.mxu0 %v1326
        %1396 = vmatpush2.xpose.msra.mxu0 %v1325
        %1397 = vmatprep.subr.mxu0 %v1324
        %1398 = vmatpush2.xpose.msra.mxu0 %v1323
        %1399 = vmatprep.subr.mxu0 %v1322
        %1400 = vmatpush2.xpose.msra.mxu0 %v1321
        %1401 = vmatprep.subr.mxu0 %v1320
        %1402 = vmatpush2.xpose.msra.mxu0 %v1319
        %1403 = vmatprep.subr.mxu0 %v1318
        %1404 = vmatpush2.xpose.msra.mxu0 %v1317
        %1405 = vmatprep.subr.mxu0 %v1316
        %1406 = vmatpush2.xpose.msra.mxu0 %v1315
        %1407 = vmatprep.subr.mxu0 %v1314
        %1408 = vmatpush2.xpose.msra.mxu0 %v1313
        %1409 = vmatprep.subr.mxu0 %v1312
        %1410 = vmatpush2.xpose.msra.mxu0 %v1311
        %1411 = vmatprep.subr.mxu0 %v1310
        %1412 = vmatpush2.xpose.msra.mxu0 %v1309
        %1413 = vmatprep.subr.mxu0 %v1308
        %1414 = vmatpush2.xpose.msra.mxu0 %v1307
        %1415 = vmatprep.subr.mxu0 %v1306
        %1416 = vmatpush2.xpose.msra.mxu0 %v1305
        %1417 = vmatprep.subr.mxu0 %v1304
        %1418 = vmatpush2.xpose.msra.mxu0 %v1303
        %1419 = vmatprep.subr.mxu0 %v1302
        %1420 = vmatpush2.xpose.msra.mxu0 %v1301
        %1421 = vmatprep.subr.mxu0 %v1300
        %1422 = vmatpush2.xpose.msra.mxu0 %v1299
        %1423 = vmatprep.subr.mxu0 %v1298
        %1424 = vmatpush2.xpose.msra.mxu0 %v1297
        %1425 = vmatprep.mubr.f32.mxu0 %v1234
        %1426 = vmatmul.mubr.f32.gmra.mxu0 %v1233
        %v1427 = vpop.f32.mrf.mxu0
        %v1428 = vadd.f32 0.0, %v1427
        %v1429 = vpop.f32.mrf.mxu0
        %v1430 = vadd.f32 0.0, %v1429
        %1431 = vmatprep.mubr.f32.mxu0 %v1236
        %1432 = vmatmul.mubr.f32.gmra.mxu0 %v1235
        %v1433 = vpop.f32.mrf.mxu0
        %v1434 = vadd.f32 0.0, %v1433
        %v1435 = vpop.f32.mrf.mxu0
        %v1436 = vadd.f32 0.0, %v1435
        %1437 = vmatprep.mubr.f32.mxu0 %v1238
        %1438 = vmatmul.mubr.f32.gmra.mxu0 %v1237
        %v1439 = vpop.f32.mrf.mxu0
        %v1440 = vadd.f32 0.0, %v1439
        %v1441 = vpop.f32.mrf.mxu0
        %v1442 = vadd.f32 0.0, %v1441
        %1443 = vmatprep.mubr.f32.mxu0 %v1240
        %1444 = vmatmul.mubr.f32.gmra.mxu0 %v1239
        %v1445 = vpop.f32.mrf.mxu0
        %v1446 = vadd.f32 0.0, %v1445
        %v1447 = vpop.f32.mrf.mxu0
        %v1448 = vadd.f32 0.0, %v1447
        %1449 = vmatprep.mubr.f32.mxu0 %v1242
        %1450 = vmatmul.mubr.f32.gmra.mxu0 %v1241
        %v1451 = vpop.f32.mrf.mxu0
        %v1452 = vadd.f32 0.0, %v1451
        %v1453 = vpop.f32.mrf.mxu0
        %v1454 = vadd.f32 0.0, %v1453
        %1455 = vmatprep.mubr.f32.mxu0 %v1244
        %1456 = vmatmul.mubr.f32.gmra.mxu0 %v1243
        %v1457 = vpop.f32.mrf.mxu0
        %v1458 = vadd.f32 0.0, %v1457
        %v1459 = vpop.f32.mrf.mxu0
        %v1460 = vadd.f32 0.0, %v1459
        %1461 = vmatprep.mubr.f32.mxu0 %v1246
        %1462 = vmatmul.mubr.f32.gmra.mxu0 %v1245
        %v1463 = vpop.f32.mrf.mxu0
        %v1464 = vadd.f32 0.0, %v1463
        %v1465 = vpop.f32.mrf.mxu0
        %v1466 = vadd.f32 0.0, %v1465
        %1467 = vmatprep.mubr.f32.mxu0 %v1248
        %1468 = vmatmul.mubr.f32.gmra.mxu0 %v1247
        %v1469 = vpop.f32.mrf.mxu0
        %v1470 = vadd.f32 0.0, %v1469
        %v1471 = vpop.f32.mrf.mxu0
        %v1472 = vadd.f32 0.0, %v1471
        %1473 = vmatprep.mubr.f32.mxu0 %v1250
        %1474 = vmatmul.mubr.f32.gmra.mxu0 %v1249
        %v1475 = vpop.f32.mrf.mxu0
        %v1476 = vadd.f32 0.0, %v1475
        %v1477 = vpop.f32.mrf.mxu0
        %v1478 = vadd.f32 0.0, %v1477
        %1479 = vmatprep.mubr.f32.mxu0 %v1252
        %1480 = vmatmul.mubr.f32.gmra.mxu0 %v1251
        %v1481 = vpop.f32.mrf.mxu0
        %v1482 = vadd.f32 0.0, %v1481
        %v1483 = vpop.f32.mrf.mxu0
        %v1484 = vadd.f32 0.0, %v1483
        %1485 = vmatprep.mubr.f32.mxu0 %v1254
        %1486 = vmatmul.mubr.f32.gmra.mxu0 %v1253
        %v1487 = vpop.f32.mrf.mxu0
        %v1488 = vadd.f32 0.0, %v1487
        %v1489 = vpop.f32.mrf.mxu0
        %v1490 = vadd.f32 0.0, %v1489
        %1491 = vmatprep.mubr.f32.mxu0 %v1256
        %1492 = vmatmul.mubr.f32.gmra.mxu0 %v1255
        %v1493 = vpop.f32.mrf.mxu0
        %v1494 = vadd.f32 0.0, %v1493
        %v1495 = vpop.f32.mrf.mxu0
        %v1496 = vadd.f32 0.0, %v1495
        %1497 = vmatprep.mubr.f32.mxu0 %v1258
        %1498 = vmatmul.mubr.f32.gmra.mxu0 %v1257
        %v1499 = vpop.f32.mrf.mxu0
        %v1500 = vadd.f32 0.0, %v1499
        %v1501 = vpop.f32.mrf.mxu0
        %v1502 = vadd.f32 0.0, %v1501
        %1503 = vmatprep.mubr.f32.mxu0 %v1260
        %1504 = vmatmul.mubr.f32.gmra.mxu0 %v1259
        %v1505 = vpop.f32.mrf.mxu0
        %v1506 = vadd.f32 0.0, %v1505
        %v1507 = vpop.f32.mrf.mxu0
        %v1508 = vadd.f32 0.0, %v1507
        %1509 = vmatprep.mubr.f32.mxu0 %v1262
        %1510 = vmatmul.mubr.f32.gmra.mxu0 %v1261
        %v1511 = vpop.f32.mrf.mxu0
        %v1512 = vadd.f32 0.0, %v1511
        %v1513 = vpop.f32.mrf.mxu0
        %v1514 = vadd.f32 0.0, %v1513
        %1515 = vmatprep.mubr.f32.mxu0 %v1264
        %1516 = vmatmul.mubr.f32.gmra.mxu0 %v1263
        %v1517 = vpop.f32.mrf.mxu0
        %v1518 = vadd.f32 0.0, %v1517
        %v1519 = vpop.f32.mrf.mxu0
        %v1520 = vadd.f32 0.0, %v1519
        %1521 = vdwg.mxu0
        %v1522 = vadd.f32 %v1329, %v1428
        %v1523 = vadd.f32 %v1330, %v1430
        %v1524 = vadd.f32 %v1331, %v1434
        %v1525 = vadd.f32 %v1332, %v1436
        %v1526 = vadd.f32 %v1333, %v1440
        %v1527 = vadd.f32 %v1334, %v1442
        %v1528 = vadd.f32 %v1335, %v1446
        %v1529 = vadd.f32 %v1336, %v1448
        %v1530 = vadd.f32 %v1337, %v1452
        %v1531 = vadd.f32 %v1338, %v1454
        %v1532 = vadd.f32 %v1339, %v1458
        %v1533 = vadd.f32 %v1340, %v1460
        %v1534 = vadd.f32 %v1341, %v1464
        %v1535 = vadd.f32 %v1342, %v1466
        %v1536 = vadd.f32 %v1343, %v1470
        %v1537 = vadd.f32 %v1344, %v1472
        %v1538 = vadd.f32 %v1345, %v1476
        %v1539 = vadd.f32 %v1346, %v1478
        %v1540 = vadd.f32 %v1347, %v1482
        %v1541 = vadd.f32 %v1348, %v1484
        %v1542 = vadd.f32 %v1349, %v1488
        %v1543 = vadd.f32 %v1350, %v1490
        %v1544 = vadd.f32 %v1351, %v1494
        %v1545 = vadd.f32 %v1352, %v1496
        %v1546 = vadd.f32 %v1353, %v1500
        %v1547 = vadd.f32 %v1354, %v1502
        %v1548 = vadd.f32 %v1355, %v1506
        %v1549 = vadd.f32 %v1356, %v1508
        %v1550 = vadd.f32 %v1357, %v1512
        %v1551 = vadd.f32 %v1358, %v1514
        %v1552 = vadd.f32 %v1359, %v1518
        %v1553 = vadd.f32 %v1360, %v1520
        %1554 = vst [vmem:[#allocation2] sm:$0xff] %v1522
        %1555 = vst [vmem:[#allocation2 + $0x8] sm:$0xff] %v1523
        %1556 = vst [vmem:[#allocation2 + $0x10] sm:$0xff] %v1524
        %1557 = vst [vmem:[#allocation2 + $0x18] sm:$0xff] %v1525
        %1558 = vst [vmem:[#allocation2 + $0x20] sm:$0xff] %v1526
        %1559 = vst [vmem:[#allocation2 + $0x28] sm:$0xff] %v1527
        %1560 = vst [vmem:[#allocation2 + $0x30] sm:$0xff] %v1528
        %1561 = vst [vmem:[#allocation2 + $0x38] sm:$0xff] %v1529
        %1562 = vst [vmem:[#allocation2 + $0x40] sm:$0xff] %v1530
        %1563 = vst [vmem:[#allocation2 + $0x48] sm:$0xff] %v1531
        %1564 = vst [vmem:[#allocation2 + $0x50] sm:$0xff] %v1532
        %1565 = vst [vmem:[#allocation2 + $0x58] sm:$0xff] %v1533
        %1566 = vst [vmem:[#allocation2 + $0x60] sm:$0xff] %v1534
        %1567 = vst [vmem:[#allocation2 + $0x68] sm:$0xff] %v1535
        %1568 = vst [vmem:[#allocation2 + $0x70] sm:$0xff] %v1536
        %1569 = vst [vmem:[#allocation2 + $0x78] sm:$0xff] %v1537
        %1570 = vst [vmem:[#allocation2 + $0x80] sm:$0xff] %v1538
        %1571 = vst [vmem:[#allocation2 + $0x88] sm:$0xff] %v1539
        %1572 = vst [vmem:[#allocation2 + $0x90] sm:$0xff] %v1540
        %1573 = vst [vmem:[#allocation2 + $0x98] sm:$0xff] %v1541
        %1574 = vst [vmem:[#allocation2 + $0xa0] sm:$0xff] %v1542
        %1575 = vst [vmem:[#allocation2 + $0xa8] sm:$0xff] %v1543
        %1576 = vst [vmem:[#allocation2 + $0xb0] sm:$0xff] %v1544
        %1577 = vst [vmem:[#allocation2 + $0xb8] sm:$0xff] %v1545
        %1578 = vst [vmem:[#allocation2 + $0xc0] sm:$0xff] %v1546
        %1579 = vst [vmem:[#allocation2 + $0xc8] sm:$0xff] %v1547
        %1580 = vst [vmem:[#allocation2 + $0xd0] sm:$0xff] %v1548
        %1581 = vst [vmem:[#allocation2 + $0xd8] sm:$0xff] %v1549
        %1582 = vst [vmem:[#allocation2 + $0xe0] sm:$0xff] %v1550
        %1583 = vst [vmem:[#allocation2 + $0xe8] sm:$0xff] %v1551
        %1584 = vst [vmem:[#allocation2 + $0xf0] sm:$0xff] %v1552
        %1585 = vst [vmem:[#allocation2 + $0xf8] sm:$0xff] %v1553
        %p1586 = scmp.eq.s32.totalorder %s33, 1
        // Predicated region
        $region61: #{tpu_custom_call.1} parent=39 // pred_check
          %p1587 = pneg %p1586
        $region62: #{tpu_custom_call.1} parent=39 // pred_check_branch
          %1589 = sbr.rel (%p1587) target = $region64
        $region63: #{tpu_custom_call.1} parent=39 // pred_region
          %v1590 = vld [vmem:[#allocation2] sm:$0xff]
          %v1591 = vld [vmem:[#allocation2 + $0x8] sm:$0xff]
          %v1592 = vld [vmem:[#allocation2 + $0x10] sm:$0xff]
          %v1593 = vld [vmem:[#allocation2 + $0x18] sm:$0xff]
          %v1594 = vld [vmem:[#allocation2 + $0x20] sm:$0xff]
          %v1595 = vld [vmem:[#allocation2 + $0x28] sm:$0xff]
          %v1596 = vld [vmem:[#allocation2 + $0x30] sm:$0xff]
          %v1597 = vld [vmem:[#allocation2 + $0x38] sm:$0xff]
          %v1598 = vld [vmem:[#allocation2 + $0x40] sm:$0xff]
          %v1599 = vld [vmem:[#allocation2 + $0x48] sm:$0xff]
          %v1600 = vld [vmem:[#allocation2 + $0x50] sm:$0xff]
          %v1601 = vld [vmem:[#allocation2 + $0x58] sm:$0xff]
          %v1602 = vld [vmem:[#allocation2 + $0x60] sm:$0xff]
          %v1603 = vld [vmem:[#allocation2 + $0x68] sm:$0xff]
          %v1604 = vld [vmem:[#allocation2 + $0x70] sm:$0xff]
          %v1605 = vld [vmem:[#allocation2 + $0x78] sm:$0xff]
          %v1606 = vld [vmem:[#allocation2 + $0x80] sm:$0xff]
          %v1607 = vld [vmem:[#allocation2 + $0x88] sm:$0xff]
          %v1608 = vld [vmem:[#allocation2 + $0x90] sm:$0xff]
          %v1609 = vld [vmem:[#allocation2 + $0x98] sm:$0xff]
          %v1610 = vld [vmem:[#allocation2 + $0xa0] sm:$0xff]
          %v1611 = vld [vmem:[#allocation2 + $0xa8] sm:$0xff]
          %v1612 = vld [vmem:[#allocation2 + $0xb0] sm:$0xff]
          %v1613 = vld [vmem:[#allocation2 + $0xb8] sm:$0xff]
          %v1614 = vld [vmem:[#allocation2 + $0xc0] sm:$0xff]
          %v1615 = vld [vmem:[#allocation2 + $0xc8] sm:$0xff]
          %v1616 = vld [vmem:[#allocation2 + $0xd0] sm:$0xff]
          %v1617 = vld [vmem:[#allocation2 + $0xd8] sm:$0xff]
          %v1618 = vld [vmem:[#allocation2 + $0xe0] sm:$0xff]
          %v1619 = vld [vmem:[#allocation2 + $0xe8] sm:$0xff]
          %v1620 = vld [vmem:[#allocation2 + $0xf0] sm:$0xff]
          %v1621 = vld [vmem:[#allocation2 + $0xf8] sm:$0xff]
          %v1622 = vld [vmem:[%s4] sm:$0x3]
          %v1624 = vlaneseq
          %v1625 = vshrl.u32 %v1624, 7
          %v1626 = vsub.s32 0, %v1625
          %v1627 = vrot.slane %v1622, %v1626
          %v1628 = vlaneseq
          %v1629 = vshrl.u32 %v1628, 7
          %v1630 = vsub.s32 1, %v1629
          %v1631 = vrot.slane %v1622, %v1630
          %v1634 = vadd.f32 %v1590, %v1627
          %v1635 = vadd.f32 %v1591, %v1631
          %v1636 = vadd.f32 %v1592, %v1627
          %v1637 = vadd.f32 %v1593, %v1631
          %v1638 = vadd.f32 %v1594, %v1627
          %v1639 = vadd.f32 %v1595, %v1631
          %v1640 = vadd.f32 %v1596, %v1627
          %v1641 = vadd.f32 %v1597, %v1631
          %v1642 = vadd.f32 %v1598, %v1627
          %v1643 = vadd.f32 %v1599, %v1631
          %v1644 = vadd.f32 %v1600, %v1627
          %v1645 = vadd.f32 %v1601, %v1631
          %v1646 = vadd.f32 %v1602, %v1627
          %v1647 = vadd.f32 %v1603, %v1631
          %v1648 = vadd.f32 %v1604, %v1627
          %v1649 = vadd.f32 %v1605, %v1631
          %v1650 = vadd.f32 %v1606, %v1627
          %v1651 = vadd.f32 %v1607, %v1631
          %v1652 = vadd.f32 %v1608, %v1627
          %v1653 = vadd.f32 %v1609, %v1631
          %v1654 = vadd.f32 %v1610, %v1627
          %v1655 = vadd.f32 %v1611, %v1631
          %v1656 = vadd.f32 %v1612, %v1627
          %v1657 = vadd.f32 %v1613, %v1631
          %v1658 = vadd.f32 %v1614, %v1627
          %v1659 = vadd.f32 %v1615, %v1631
          %v1660 = vadd.f32 %v1616, %v1627
          %v1661 = vadd.f32 %v1617, %v1631
          %v1662 = vadd.f32 %v1618, %v1627
          %v1663 = vadd.f32 %v1619, %v1631
          %v1664 = vadd.f32 %v1620, %v1627
          %v1665 = vadd.f32 %v1621, %v1631
          %1666 = vst [vmem:[%s396] sm:$0xff] %v1634
          %1667 = vst [vmem:[%s396 + $0x8] sm:$0xff] %v1635
          %1668 = vst [vmem:[%s396 + $0x10] sm:$0xff] %v1636
          %1669 = vst [vmem:[%s396 + $0x18] sm:$0xff] %v1637
          %1670 = vst [vmem:[%s396 + $0x20] sm:$0xff] %v1638
          %1671 = vst [vmem:[%s396 + $0x28] sm:$0xff] %v1639
          %1672 = vst [vmem:[%s396 + $0x30] sm:$0xff] %v1640
          %1673 = vst [vmem:[%s396 + $0x38] sm:$0xff] %v1641
          %1674 = vst [vmem:[%s396 + $0x40] sm:$0xff] %v1642
          %1675 = vst [vmem:[%s396 + $0x48] sm:$0xff] %v1643
          %1676 = vst [vmem:[%s396 + $0x50] sm:$0xff] %v1644
          %1677 = vst [vmem:[%s396 + $0x58] sm:$0xff] %v1645
          %1678 = vst [vmem:[%s396 + $0x60] sm:$0xff] %v1646
          %1679 = vst [vmem:[%s396 + $0x68] sm:$0xff] %v1647
          %1680 = vst [vmem:[%s396 + $0x70] sm:$0xff] %v1648
          %1681 = vst [vmem:[%s396 + $0x78] sm:$0xff] %v1649
          %1682 = vst [vmem:[%s396 + $0x80] sm:$0xff] %v1650
          %1683 = vst [vmem:[%s396 + $0x88] sm:$0xff] %v1651
          %1684 = vst [vmem:[%s396 + $0x90] sm:$0xff] %v1652
          %1685 = vst [vmem:[%s396 + $0x98] sm:$0xff] %v1653
          %1686 = vst [vmem:[%s396 + $0xa0] sm:$0xff] %v1654
          %1687 = vst [vmem:[%s396 + $0xa8] sm:$0xff] %v1655
          %1688 = vst [vmem:[%s396 + $0xb0] sm:$0xff] %v1656
          %1689 = vst [vmem:[%s396 + $0xb8] sm:$0xff] %v1657
          %1690 = vst [vmem:[%s396 + $0xc0] sm:$0xff] %v1658
          %1691 = vst [vmem:[%s396 + $0xc8] sm:$0xff] %v1659
          %1692 = vst [vmem:[%s396 + $0xd0] sm:$0xff] %v1660
          %1693 = vst [vmem:[%s396 + $0xd8] sm:$0xff] %v1661
          %1694 = vst [vmem:[%s396 + $0xe0] sm:$0xff] %v1662
          %1695 = vst [vmem:[%s396 + $0xe8] sm:$0xff] %v1663
          %1696 = vst [vmem:[%s396 + $0xf0] sm:$0xff] %v1664
          %1697 = vst [vmem:[%s396 + $0xf8] sm:$0xff] %v1665
        $region64: #{tpu_custom_call.1} parent=39 // pred_fallthru
          _
        %s1698 = sand.u32 %s173, 1
        %s1699 = scalar_lea.sflag [#allocation5], %s1698
        %s1700 = sand.u32 %s173, 1
        %s1701 = smul.addr %s1700, 256
        %s1702 = scalar_lea.vmem [#allocation11], %s1701
        // Predicated region
        $region65: #{tpu_custom_call.1} parent=39 // pred_check
          %p1703 = pneg %p183
        $region66: #{tpu_custom_call.1} parent=39 // pred_check_branch
          %1705 = sbr.rel (%p1703) target = $region68
        $region67: #{tpu_custom_call.1} parent=39 // pred_region
          %s1706 = smul.u32 16, %s32
          %s1708 = ssub.s32 4096, 4096
          %1709 = vsyncadd %s1699, %s1708
          %s1710 = smul.addr %s1706, 2
          %s1711 = smul.addr %s1710, 128
          %s1712 = scalar_lea.hbm %s5, %s1711
          %s1713 = sshll.u32 %s1702, 4
          %s1714 = int_to_ptr.vmem [resolvable:$true] %s1713
          %1719 = dma.vmem_to_hbm [thread:$0]  %s1714, 4096, %s1712, %s1699, 256, 256, 16
        $region68: #{tpu_custom_call.1} parent=39 // pred_fallthru
          _
      $region40: #{tpu_custom_call.1} parent=5 // pred_fallthru
        _
      %p1720 = scmp.le.s32.totalorder 2, %s23
      // Predicated region
      $region69: #{tpu_custom_call.1} parent=5 // pred_check
        %p1721 = pneg %p1720
      $region70: #{tpu_custom_call.1} parent=5 // pred_check_branch
        %1723 = sbr.rel (%p1721) target = $region72
      $region71: #{tpu_custom_call.1} parent=5 // pred_region
        %s1724 = ssub.s32 %s23, 2
        // Predicated region
        $region73: #{tpu_custom_call.1} parent=71 // pred_check
          %p1725 = pneg %p189
        $region74: #{tpu_custom_call.1} parent=71 // pred_check_branch
          %1727 = sbr.rel (%p1725) target = $region76
        $region75: #{tpu_custom_call.1} parent=71 // pred_region
          %s1728 = sand.u32 %s174, 1
          %s1729 = scalar_lea.sflag [#allocation5], %s1728
          %s1730 = sand.u32 %s174, 1
          %s1731 = smul.addr %s1730, 256
          %s1732 = scalar_lea.vmem [#allocation11], %s1731
          %1733 = dma.done %s1729, 4096
        $region76: #{tpu_custom_call.1} parent=71 // pred_fallthru
          _
      $region72: #{tpu_custom_call.1} parent=5 // pred_fallthru
        _
    $region6: #{tpu_custom_call.1} parent=1 // loop_footer
      %s27 = sadd.s32 1, %s23
    $region7: #{tpu_custom_call.1} parent=1 // loop_footer_branch
      %22 = sbr.rel target = $region3
    $region8: #{tpu_custom_call.1} parent=1 // loop_exit
      _
    %1734 = vsyncpa [#allocation4], 1
    %s1735 = scalar_lea.sflag [#allocation4], 1
    %1736 = vsyncpa %s1735, 1
    %1737 = vsyncpa [#allocation7], 1
    %s1738 = scalar_lea.sflag [#allocation7], 1
    %1739 = vsyncpa %s1738, 1
    %1740 = vsyncpa [#allocation10], 1
    %s1741 = scalar_lea.sflag [#allocation10], 1
    %1742 = vsyncpa %s1741, 1
    %1743 = vsyncpa [#allocation5], 1
    %s1744 = scalar_lea.sflag [#allocation5], 1
    %1745 = vsyncpa %s1744, 1

</llo_original>
